<compile_context>
chip_gen: v7x
topology: tpu7x:2x2x1
jax: 0.10.0
libtpu: 0.0.40
codegen_flags: <defaults>
</compile_context>

<pallas_src>
import jax
import jax.numpy as jnp
from jax.experimental import pallas as pl
from jax.experimental.pallas import tpu as pltpu

# ---------------- model sizes ----------------
B = 2                       # batch
C, Hs, Ws = 4, 16, 16
D_IN = C * Hs * Ws          # 1024
HID = 256                   # MLP hidden width
LAT = 128                   # latent dim

# static row offsets inside the packed weight slab (all multiples of 16,
# i.e. bf16 sublane-tile aligned)
_W1_OFF = 0
_W2_OFF = D_IN                       # 1024
_WD1_OFF = D_IN + HID                # 1280
_WPACK_ROWS = D_IN + HID + LAT       # 1408

# static column offsets inside the packed bias slab (all multiples of 128)
_B1_OFF = 0
_B2_OFF = HID                        # 256
_BD1_OFF = HID + 2 * LAT             # 512
_BD2_OFF = 2 * HID + 2 * LAT         # 768
_BIAS_COLS = 2 * HID + 2 * LAT + D_IN  # 1792


def _vae_kernel(x_ref, wpack_ref, wd2_ref, bias_ref, noise_ref,
                recs_ref, mu_ref, logvar_ref):
    # packed bf16 weights (static, 128-lane / 16-sublane aligned slices)
    w1 = wpack_ref[_W1_OFF:_W1_OFF + D_IN, :]      # (1024, 256) bf16
    w2 = wpack_ref[_W2_OFF:_W2_OFF + HID, :]       # (256, 256)  bf16
    wd1 = wpack_ref[_WD1_OFF:_WD1_OFF + LAT, :]    # (128, 256)  bf16
    b1 = bias_ref[:, _B1_OFF:_B1_OFF + HID]        # (1, 256) f32
    b2 = bias_ref[:, _B2_OFF:_B2_OFF + 2 * LAT]    # (1, 256) f32
    bd1 = bias_ref[:, _BD1_OFF:_BD1_OFF + HID]     # (1, 256) f32
    bd2 = bias_ref[:, _BD2_OFF:]                   # (1, 1024) f32

    # ---- encoder MLP (bf16 MXU inputs, f32 accumulation) ----
    x = x_ref[...].astype(jnp.bfloat16)                              # (M, 1024)
    h = jnp.dot(x, w1, preferred_element_type=jnp.float32) + b1
    h = jnp.maximum(h, 0.0)
    enc = jnp.dot(h.astype(jnp.bfloat16), w2,
                  preferred_element_type=jnp.float32) + b2           # (M, 256)
    # encoder head packs [mu | logvar] along the feature axis; equivalent to
    # VAE_Module's batch-stack then row-split at x.shape[0].
    mu = enc[:, :LAT]
    logvar = enc[:, LAT:]

    # ---- reparameterization: randn * exp(0.5*logvar) + mu ----
    z = noise_ref[...] * jnp.exp(0.5 * logvar) + mu                  # (M, 128)

    # ---- decoder MLP ----
    hd = jnp.dot(z.astype(jnp.bfloat16), wd1,
                 preferred_element_type=jnp.float32) + bd1
    hd = jnp.maximum(hd, 0.0)
    recs = jnp.dot(hd.astype(jnp.bfloat16), wd2_ref[...],
                   preferred_element_type=jnp.float32) + bd2         # (M, 1024)

    recs_ref[...] = recs
    mu_ref[...] = mu
    logvar_ref[...] = logvar


def vae_forward(x_nchw, packed_params, noise):
    """x_nchw: (B, C, H, W) f32. Returns (recs_nchw, mu, logvar)."""
    wpack, wd2, bias = packed_params
    b = x_nchw.shape[0]
    x_flat = x_nchw.reshape(b, -1).astype(jnp.float32)               # (B, 1024)

    # pick an M tile: full 128 rows once the batch can feed the MXU,
    # otherwise the smallest sublane-aligned tile.
    tile_m = 128 if b >= 128 else max(8, ((b + 7) // 8) * 8)
    m_pad = ((b + tile_m - 1) // tile_m) * tile_m
    if m_pad != b:
        x_flat = jnp.pad(x_flat, ((0, m_pad - b), (0, 0)))
        noise_p = jnp.pad(noise, ((0, m_pad - b), (0, 0)))
    else:
        noise_p = noise
    grid = (m_pad // tile_m,)

    weight_bytes = wpack.size * 2 + wd2.size * 2 + bias.size * 4
    io_bytes = m_pad * (D_IN * 4 + LAT * 4 + D_IN * 4 + 2 * LAT * 4)
    flops = 2 * m_pad * (D_IN * HID + HID * 2 * LAT + LAT * HID + HID * D_IN)

    out_shapes = (
        jax.ShapeDtypeStruct((m_pad, D_IN), jnp.float32),            # recs
        jax.ShapeDtypeStruct((m_pad, LAT), jnp.float32),             # mu
        jax.ShapeDtypeStruct((m_pad, LAT), jnp.float32),             # logvar
    )

    recs_flat, mu, logvar = pl.pallas_call(
        _vae_kernel,
        out_shape=out_shapes,
        grid=grid,
        in_specs=[
            pl.BlockSpec((tile_m, D_IN), lambda i: (i, 0)),          # x
            pl.BlockSpec((_WPACK_ROWS, HID), lambda i: (0, 0)),      # wpack (resident)
            pl.BlockSpec((HID, D_IN), lambda i: (0, 0)),             # wd2   (resident)
            pl.BlockSpec((1, _BIAS_COLS), lambda i: (0, 0)),         # biases(resident)
            pl.BlockSpec((tile_m, LAT), lambda i: (i, 0)),           # noise
        ],
        out_specs=[
            pl.BlockSpec((tile_m, D_IN), lambda i: (i, 0)),
            pl.BlockSpec((tile_m, LAT), lambda i: (i, 0)),
            pl.BlockSpec((tile_m, LAT), lambda i: (i, 0)),
        ],
        compiler_params=pltpu.CompilerParams(
            dimension_semantics=("parallel",)),
        cost_estimate=pl.CostEstimate(
            flops=flops,
            transcendentals=m_pad * LAT,
            bytes_accessed=weight_bytes + io_bytes),
    )(x_flat, wpack, wd2, bias, noise_p)

    return recs_flat[:b].reshape(x_nchw.shape), mu[:b], logvar[:b]


def init_packed_params(key):
    """Synthetic parameters, pre-packed for the kernel.

    Returns (wpack bf16 (1408,256), wd2 bf16 (256,1024), bias f32 (1,1792)).
    """
    ks = jax.random.split(key, 8)
    scale = 0.02
    w1 = scale * jax.random.normal(ks[0], (D_IN, HID), jnp.float32)
    b1 = scale * jax.random.normal(ks[1], (1, HID), jnp.float32)
    w2 = scale * jax.random.normal(ks[2], (HID, 2 * LAT), jnp.float32)
    b2 = scale * jax.random.normal(ks[3], (1, 2 * LAT), jnp.float32)
    wd1 = scale * jax.random.normal(ks[4], (LAT, HID), jnp.float32)
    bd1 = scale * jax.random.normal(ks[5], (1, HID), jnp.float32)
    wd2 = scale * jax.random.normal(ks[6], (HID, D_IN), jnp.float32)
    bd2 = scale * jax.random.normal(ks[7], (1, D_IN), jnp.float32)

    wpack = jnp.concatenate([w1, w2, wd1], axis=0).astype(jnp.bfloat16)
    wd2_bf = wd2.astype(jnp.bfloat16)
    bias = jnp.concatenate([b1, b2, bd1, bd2], axis=1).astype(jnp.float32)
    return (wpack, wd2_bf, bias)


def reference_forward(x_nchw, packed_params, noise):
    """Pure-JAX reference mirroring the kernel's bf16-weight numerics."""
    wpack, wd2, bias = packed_params
    w1 = wpack[_W1_OFF:_W1_OFF + D_IN]
    w2 = wpack[_W2_OFF:_W2_OFF + HID]
    wd1 = wpack[_WD1_OFF:_WD1_OFF + LAT]
    b1 = bias[:, _B1_OFF:_B1_OFF + HID]
    b2 = bias[:, _B2_OFF:_B2_OFF + 2 * LAT]
    bd1 = bias[:, _BD1_OFF:_BD1_OFF + HID]
    bd2 = bias[:, _BD2_OFF:]

    x = x_nchw.reshape(x_nchw.shape[0], -1).astype(jnp.float32)
    bf = lambda a: a.astype(jnp.bfloat16)
    h = jnp.maximum(jnp.dot(bf(x), w1, preferred_element_type=jnp.float32) + b1, 0.0)
    enc = jnp.dot(bf(h), w2, preferred_element_type=jnp.float32) + b2
    # encoder_out stacked along batch then split by rows (as in VAE_Module)
    enc_out = jnp.concatenate([enc[:, :LAT], enc[:, LAT:]], axis=0)
    mu, logvar = enc_out[:x.shape[0]], enc_out[x.shape[0]:]
    z = noise * jnp.exp(0.5 * logvar) + mu
    hd = jnp.maximum(jnp.dot(bf(z), wd1, preferred_element_type=jnp.float32) + bd1, 0.0)
    recs = jnp.dot(bf(hd), wd2, preferred_element_type=jnp.float32) + bd2
    return recs.reshape(x_nchw.shape), mu, logvar


if __name__ == "__main__":
    key = jax.random.PRNGKey(0)
    kx, kn, kp = jax.random.split(key, 3)

    x = jax.random.normal(kx, (B, C, Hs, Ws), jnp.float32)
    noise = jax.random.normal(kn, (B, LAT), jnp.float32)   # torch.randn_like(mu)
    params = init_packed_params(kp)

    recs, mu, logvar = jax.block_until_ready(vae_forward(x, params, noise))

    recs_ref, mu_ref, logvar_ref = reference_forward(x, params, noise)
    assert recs.shape == (B, C, Hs, Ws)
    assert mu.shape == (B, LAT) and logvar.shape == (B, LAT)
    assert jnp.allclose(recs, recs_ref, atol=2e-3, rtol=2e-2)
    assert jnp.allclose(mu, mu_ref, atol=1e-3, rtol=1e-2)
    assert jnp.allclose(logvar, logvar_ref, atol=1e-3, rtol=1e-2)

    print("KERNEL_OK")
</pallas_src>

<mosaic_0001>
module attributes {stable_mosaic.version = 11 : i64} {
  func.func @_vae_kernel(%arg0: i32, %arg1: memref<8x1024xf32, #tpu.memory_space<vmem>>, %arg2: memref<1408x256xbf16, #tpu.memory_space<vmem>>, %arg3: memref<256x1024xbf16, #tpu.memory_space<vmem>>, %arg4: memref<1x1792xf32, #tpu.memory_space<vmem>>, %arg5: memref<8x128xf32, #tpu.memory_space<vmem>>, %arg6: memref<8x1024xf32, #tpu.memory_space<vmem>>, %arg7: memref<8x128xf32, #tpu.memory_space<vmem>>, %arg8: memref<8x128xf32, #tpu.memory_space<vmem>>) attributes {dimension_semantics = [#tpu.dimension_semantics<parallel>], iteration_bounds = array<i64: 1>, scalar_prefetch = 0 : i64, scratch_operands = 0 : i64, tpu.core_type = #tpu.core_type<tc>, window_params = [{transform_indices = @transform_0, window_bounds = array<i64: 8, 1024>}, {pipeline_mode = #tpu.pipeline_mode<synchronous>, transform_indices = @transform_1, window_bounds = array<i64: 1408, 256>}, {pipeline_mode = #tpu.pipeline_mode<synchronous>, transform_indices = @transform_2, window_bounds = array<i64: 256, 1024>}, {pipeline_mode = #tpu.pipeline_mode<synchronous>, transform_indices = @transform_3, window_bounds = array<i64: 1, 1792>}, {transform_indices = @transform_4, window_bounds = array<i64: 8, 128>}, {transform_indices = @transform_5, window_bounds = array<i64: 8, 1024>}, {transform_indices = @transform_6, window_bounds = array<i64: 8, 128>}, {transform_indices = @transform_7, window_bounds = array<i64: 8, 128>}]} {
    %c0 = arith.constant 0 : index
    %c0_0 = arith.constant 0 : index
    %0 = vector.load %arg2[%c0, %c0_0] : memref<1408x256xbf16, #tpu.memory_space<vmem>>, vector<1024x256xbf16>
    %c1024 = arith.constant 1024 : index
    %c0_1 = arith.constant 0 : index
    %1 = vector.load %arg2[%c1024, %c0_1] : memref<1408x256xbf16, #tpu.memory_space<vmem>>, vector<256x256xbf16>
    %c1280 = arith.constant 1280 : index
    %c0_2 = arith.constant 0 : index
    %2 = vector.load %arg2[%c1280, %c0_2] : memref<1408x256xbf16, #tpu.memory_space<vmem>>, vector<128x256xbf16>
    %c0_3 = arith.constant 0 : index
    %c0_4 = arith.constant 0 : index
    %3 = vector.load %arg4[%c0_3, %c0_4] : memref<1x1792xf32, #tpu.memory_space<vmem>>, vector<1x256xf32>
    %c0_5 = arith.constant 0 : index
    %c256 = arith.constant 256 : index
    %4 = vector.load %arg4[%c0_5, %c256] : memref<1x1792xf32, #tpu.memory_space<vmem>>, vector<1x256xf32>
    %c0_6 = arith.constant 0 : index
    %c512 = arith.constant 512 : index
    %5 = vector.load %arg4[%c0_6, %c512] : memref<1x1792xf32, #tpu.memory_space<vmem>>, vector<1x256xf32>
    %c0_7 = arith.constant 0 : index
    %c768 = arith.constant 768 : index
    %6 = vector.load %arg4[%c0_7, %c768] : memref<1x1792xf32, #tpu.memory_space<vmem>>, vector<1x1024xf32>
    %c0_8 = arith.constant 0 : index
    %c0_9 = arith.constant 0 : index
    %7 = vector.load %arg1[%c0_8, %c0_9] : memref<8x1024xf32, #tpu.memory_space<vmem>>, vector<8x1024xf32>
    %8 = arith.truncf %7 : vector<8x1024xf32> to vector<8x1024xbf16>
    %cst = arith.constant dense<0.000000e+00> : vector<8x256xf32>
    %9 = tpu.matmul %8, %0, %cst {dimension_numbers = #tpu.dot_dimension_numbers<[1], [0], [0], [1], [0, 0, 1, 1], [], []>} : vector<8x1024xbf16>, vector<1024x256xbf16>, vector<8x256xf32> -> vector<8x256xf32>
    %10 = vector.broadcast %3 : vector<1x256xf32> to vector<8x256xf32>
    %11 = arith.addf %9, %10 : vector<8x256xf32>
    %cst_10 = arith.constant 0.000000e+00 : f32
    %12 = vector.broadcast %cst_10 : f32 to vector<8x256xf32>
    %13 = arith.maximumf %11, %12 : vector<8x256xf32>
    %14 = arith.truncf %13 : vector<8x256xf32> to vector<8x256xbf16>
    %cst_11 = arith.constant dense<0.000000e+00> : vector<8x256xf32>
    %15 = tpu.matmul %14, %1, %cst_11 {dimension_numbers = #tpu.dot_dimension_numbers<[1], [0], [0], [1], [0, 0, 1, 1], [], []>} : vector<8x256xbf16>, vector<256x256xbf16>, vector<8x256xf32> -> vector<8x256xf32>
    %16 = vector.broadcast %4 : vector<1x256xf32> to vector<8x256xf32>
    %17 = arith.addf %15, %16 : vector<8x256xf32>
    %18 = vector.extract_strided_slice %17 {offsets = [0, 0], sizes = [8, 128], strides = [1, 1]} : vector<8x256xf32> to vector<8x128xf32>
    %19 = vector.extract_strided_slice %17 {offsets = [0, 128], sizes = [8, 128], strides = [1, 1]} : vector<8x256xf32> to vector<8x128xf32>
    %c0_12 = arith.constant 0 : index
    %c0_13 = arith.constant 0 : index
    %20 = vector.load %arg5[%c0_12, %c0_13] : memref<8x128xf32, #tpu.memory_space<vmem>>, vector<8x128xf32>
    %cst_14 = arith.constant 5.000000e-01 : f32
    %21 = vector.broadcast %cst_14 : f32 to vector<8x128xf32>
    %22 = arith.mulf %21, %19 : vector<8x128xf32>
    %23 = math.exp %22 : vector<8x128xf32>
    %24 = arith.mulf %20, %23 : vector<8x128xf32>
    %25 = arith.addf %24, %18 : vector<8x128xf32>
    %26 = arith.truncf %25 : vector<8x128xf32> to vector<8x128xbf16>
    %cst_15 = arith.constant dense<0.000000e+00> : vector<8x256xf32>
    %27 = tpu.matmul %26, %2, %cst_15 {dimension_numbers = #tpu.dot_dimension_numbers<[1], [0], [0], [1], [0, 0, 1, 1], [], []>} : vector<8x128xbf16>, vector<128x256xbf16>, vector<8x256xf32> -> vector<8x256xf32>
    %28 = vector.broadcast %5 : vector<1x256xf32> to vector<8x256xf32>
    %29 = arith.addf %27, %28 : vector<8x256xf32>
    %cst_16 = arith.constant 0.000000e+00 : f32
    %30 = vector.broadcast %cst_16 : f32 to vector<8x256xf32>
    %31 = arith.maximumf %29, %30 : vector<8x256xf32>
    %32 = arith.truncf %31 : vector<8x256xf32> to vector<8x256xbf16>
    %c0_17 = arith.constant 0 : index
    %c0_18 = arith.constant 0 : index
    %33 = vector.load %arg3[%c0_17, %c0_18] : memref<256x1024xbf16, #tpu.memory_space<vmem>>, vector<256x1024xbf16>
    %cst_19 = arith.constant dense<0.000000e+00> : vector<8x1024xf32>
    %34 = tpu.matmul %32, %33, %cst_19 {dimension_numbers = #tpu.dot_dimension_numbers<[1], [0], [0], [1], [0, 0, 1, 1], [], []>} : vector<8x256xbf16>, vector<256x1024xbf16>, vector<8x1024xf32> -> vector<8x1024xf32>
    %35 = vector.broadcast %6 : vector<1x1024xf32> to vector<8x1024xf32>
    %36 = arith.addf %34, %35 : vector<8x1024xf32>
    %c0_20 = arith.constant 0 : index
    %c0_21 = arith.constant 0 : index
    %37 = vector.load %arg6[%c0_20, %c0_21] : memref<8x1024xf32, #tpu.memory_space<vmem>>, vector<8x1024xf32>
    tpu.vector_store %arg6[%c0_20, %c0_21], %36 {strides = array<i32>} : memref<8x1024xf32, #tpu.memory_space<vmem>>, vector<8x1024xf32>,
    %c0_22 = arith.constant 0 : index
    %c0_23 = arith.constant 0 : index
    %38 = vector.load %arg7[%c0_22, %c0_23] : memref<8x128xf32, #tpu.memory_space<vmem>>, vector<8x128xf32>
    tpu.vector_store %arg7[%c0_22, %c0_23], %18 {strides = array<i32>} : memref<8x128xf32, #tpu.memory_space<vmem>>, vector<8x128xf32>,
    %c0_24 = arith.constant 0 : index
    %c0_25 = arith.constant 0 : index
    %39 = vector.load %arg8[%c0_24, %c0_25] : memref<8x128xf32, #tpu.memory_space<vmem>>, vector<8x128xf32>
    tpu.vector_store %arg8[%c0_24, %c0_25], %19 {strides = array<i32>} : memref<8x128xf32, #tpu.memory_space<vmem>>, vector<8x128xf32>,
    return
  }
  func.func @transform_0(%arg0: i32) -> (i32, i32) {
    %c0_i32 = arith.constant 0 : i32
    %c0_i32_0 = arith.constant 0 : i32
    return %arg0, %c0_i32 : i32, i32
  }
  func.func @transform_1(%arg0: i32) -> (i32, i32) {
    %c0_i32 = arith.constant 0 : i32
    %c0_i32_0 = arith.constant 0 : i32
    %c0_i32_1 = arith.constant 0 : i32
    return %c0_i32, %c0_i32_0 : i32, i32
  }
  func.func @transform_2(%arg0: i32) -> (i32, i32) {
    %c0_i32 = arith.constant 0 : i32
    %c0_i32_0 = arith.constant 0 : i32
    %c0_i32_1 = arith.constant 0 : i32
    return %c0_i32, %c0_i32_0 : i32, i32
  }
  func.func @transform_3(%arg0: i32) -> (i32, i32) {
    %c0_i32 = arith.constant 0 : i32
    %c0_i32_0 = arith.constant 0 : i32
    %c0_i32_1 = arith.constant 0 : i32
    return %c0_i32, %c0_i32_0 : i32, i32
  }
  func.func @transform_4(%arg0: i32) -> (i32, i32) {
    %c0_i32 = arith.constant 0 : i32
    %c0_i32_0 = arith.constant 0 : i32
    return %arg0, %c0_i32 : i32, i32
  }
  func.func @transform_5(%arg0: i32) -> (i32, i32) {
    %c0_i32 = arith.constant 0 : i32
    %c0_i32_0 = arith.constant 0 : i32
    return %arg0, %c0_i32 : i32, i32
  }
  func.func @transform_6(%arg0: i32) -> (i32, i32) {
    %c0_i32 = arith.constant 0 : i32
    %c0_i32_0 = arith.constant 0 : i32
    return %arg0, %c0_i32 : i32, i32
  }
  func.func @transform_7(%arg0: i32) -> (i32, i32) {
    %c0_i32 = arith.constant 0 : i32
    %c0_i32_0 = arith.constant 0 : i32
    return %arg0, %c0_i32 : i32, i32
  }
}

</mosaic_0001>

<llo_original>
// kernel: tpu_custom_call.1
$region0: #{tpu_custom_call.1}
  #allocation0 [shape = 'u32[]', space=smem, size = 0x4, offset = 0x4, fixed_abs, tag = 'smem constant byte address 0x4 - core index']
  #allocation1 [shape = 'u32[144,128]{1,0:T(1,128)}', space=vmem, size = 0x12000, scoped, tag = 'internal scratch']
  %s0 = inlined_call_operand.hbm [shape: f32[8,1024], index: 0, kind: input, shape index: {}]
  %s1 = inlined_call_operand.hbm [shape: bf16[1408,256], index: 1, kind: input, shape index: {}]
  %s2 = inlined_call_operand.hbm [shape: bf16[256,1024], index: 2, kind: input, shape index: {}]
  %s3 = inlined_call_operand.hbm [shape: f32[1,1792], index: 3, kind: input, shape index: {}]
  %s4 = inlined_call_operand.vmem [shape: f32[8,128], index: 4, kind: input, shape index: {}]
  %s5 = inlined_call_operand.hbm [shape: f32[8,1024], index: 5, kind: output, shape index: {0}]
  %s6 = inlined_call_operand.hbm [shape: f32[8,128], index: 6, kind: output, shape index: {1}]
  %s7 = inlined_call_operand.hbm [shape: f32[8,128], index: 7, kind: output, shape index: {2}]
  %8 = xla_tuple %s5, %s6, %s7
  %s9 = sld [smem:[#allocation0]]
  $region62: #{tpu_custom_call.1} parent=0
    _
  %s11 = ssub.s32 1, %s9
  %s12 = scalar_select 0, %s11, %s9
  $region1: #{tpu_custom_call.1} parent=0
    #allocation2 [shape = 'u8[32768]{0}', space=vmem, size = 0x8000, scoped, tag = 'input window, operand 0, single buffered']
    #allocation3 [shape = 's32[1]{0}', space=sflag, size = 0x4, scoped, tag = 'scoped memory for tpu_custom_call.1']
    #allocation4 [shape = 's32[1]{0}', space=sflag, size = 0x4, scoped, tag = 'scoped memory for tpu_custom_call.1']
    #allocation5 [shape = 'u8[720896]{0}', space=vmem, size = 0xb0000, scoped, tag = 'input window, operand 1, single buffered']
    #allocation6 [shape = 's32[1]{0}', space=sflag, size = 0x4, scoped, tag = 'scoped memory for tpu_custom_call.1']
    #allocation7 [shape = 'u8[524288]{0}', space=vmem, size = 0x80000, scoped, tag = 'input window, operand 2, single buffered']
    #allocation8 [shape = 'u8[7168]{0}', space=vmem, size = 0x1c00, scoped, tag = 'input window, operand 3, single buffered']
    #allocation9 [shape = 's32[1]{0}', space=sflag, size = 0x4, scoped, tag = 'scoped memory for tpu_custom_call.1']
    #allocation10 [shape = 'u8[32768]{0}', space=vmem, size = 0x8000, scoped, tag = 'output window, operand 0, single buffered']
    #allocation11 [shape = 'u8[4096]{0}', space=vmem, size = 0x1000, scoped, tag = 'output window, operand 1, single buffered']
    #allocation12 [shape = 's32[1]{0}', space=sflag, size = 0x4, scoped, tag = 'scoped memory for tpu_custom_call.1']
    #allocation13 [shape = 'u8[4096]{0}', space=vmem, size = 0x1000, scoped, tag = 'output window, operand 2, single buffered']
    %13 = vsyncpa [#allocation3], 0
    %14 = vsyncpa [#allocation6], 0
    %15 = vsyncpa [#allocation9], 0
    %16 = vsyncpa [#allocation4], 0
    %17 = vsyncpa [#allocation12], 0
    // Predicated region
    $region2: #{tpu_custom_call.1} parent=1 // pred_check
      _
    $region3: #{tpu_custom_call.1} parent=1 // pred_check_branch
      %19 = sbr.rel (0) target = $region5
    $region4: #{tpu_custom_call.1} parent=1 // pred_region
      %s21 = ssub.s32 1024, 1024
      %22 = vsyncadd [#allocation3], %s21
      %s24 = sshll.u32 [#allocation2], 4
      %s25 = int_to_ptr.vmem [resolvable:$true] %s24
      %27 = dma.hbm_to_vmem [thread:$0]  %s0, 1024, %s25, [#allocation3]
    $region5: #{tpu_custom_call.1} parent=1 // pred_fallthru
      _
    // Predicated region
    $region6: #{tpu_custom_call.1} parent=1 // pred_check
      _
    $region7: #{tpu_custom_call.1} parent=1 // pred_check_branch
      %29 = sbr.rel (0) target = $region9
    $region8: #{tpu_custom_call.1} parent=1 // pred_region
      %s31 = ssub.s32 22528, 22528
      %32 = vsyncadd [#allocation6], %s31
      %s33 = sshll.u32 [#allocation5], 4
      %s34 = int_to_ptr.vmem [resolvable:$true] %s33
      %39 = dma.hbm_to_vmem [thread:$0]  %s1, 22528, %s34, [#allocation6], 128, 128, 8
    $region9: #{tpu_custom_call.1} parent=1 // pred_fallthru
      _
    // Predicated region
    $region10: #{tpu_custom_call.1} parent=1 // pred_check
      _
    $region11: #{tpu_custom_call.1} parent=1 // pred_check_branch
      %41 = sbr.rel (0) target = $region13
    $region12: #{tpu_custom_call.1} parent=1 // pred_region
      %s43 = ssub.s32 16384, 16384
      %44 = vsyncadd [#allocation6], %s43
      %s45 = sshll.u32 [#allocation7], 4
      %s46 = int_to_ptr.vmem [resolvable:$true] %s45
      %51 = dma.hbm_to_vmem [thread:$0]  %s2, 16384, %s46, [#allocation6], 512, 512, 32
    $region13: #{tpu_custom_call.1} parent=1 // pred_fallthru
      _
    // Predicated region
    $region14: #{tpu_custom_call.1} parent=1 // pred_check
      _
    $region15: #{tpu_custom_call.1} parent=1 // pred_check_branch
      %53 = sbr.rel (0) target = $region17
    $region16: #{tpu_custom_call.1} parent=1 // pred_region
      %s55 = ssub.s32 224, 224
      %56 = vsyncadd [#allocation9], %s55
      %s58 = sshll.u32 [#allocation8], 4
      %s59 = int_to_ptr.vmem [resolvable:$true] %s58
      %61 = dma.hbm_to_vmem [thread:$0]  %s3, 224, %s59, [#allocation9]
    $region17: #{tpu_custom_call.1} parent=1 // pred_fallthru
      _
    // Predicated region
    $region18: #{tpu_custom_call.1} parent=1 // pred_check
      _
    $region19: #{tpu_custom_call.1} parent=1 // pred_check_branch
      %63 = sbr.rel (0) target = $region21
    $region20: #{tpu_custom_call.1} parent=1 // pred_region
      _
    $region21: #{tpu_custom_call.1} parent=1 // pred_fallthru
      _
    // Predicated region
    $region22: #{tpu_custom_call.1} parent=1 // pred_check
      _
    $region23: #{tpu_custom_call.1} parent=1 // pred_check_branch
      %65 = sbr.rel (0) target = $region25
    $region24: #{tpu_custom_call.1} parent=1 // pred_region
      %66 = dma.done [#allocation3], 1024
    $region25: #{tpu_custom_call.1} parent=1 // pred_fallthru
      _
    // Predicated region
    $region26: #{tpu_custom_call.1} parent=1 // pred_check
      _
    $region27: #{tpu_custom_call.1} parent=1 // pred_check_branch
      %68 = sbr.rel (0) target = $region29
    $region28: #{tpu_custom_call.1} parent=1 // pred_region
      %69 = dma.done [#allocation6], 22528
    $region29: #{tpu_custom_call.1} parent=1 // pred_fallthru
      _
    // Predicated region
    $region30: #{tpu_custom_call.1} parent=1 // pred_check
      _
    $region31: #{tpu_custom_call.1} parent=1 // pred_check_branch
      %71 = sbr.rel (0) target = $region33
    $region32: #{tpu_custom_call.1} parent=1 // pred_region
      %72 = dma.done [#allocation6], 16384
    $region33: #{tpu_custom_call.1} parent=1 // pred_fallthru
      _
    // Predicated region
    $region34: #{tpu_custom_call.1} parent=1 // pred_check
      _
    $region35: #{tpu_custom_call.1} parent=1 // pred_check_branch
      %74 = sbr.rel (0) target = $region37
    $region36: #{tpu_custom_call.1} parent=1 // pred_region
      %75 = dma.done [#allocation9], 224
    $region37: #{tpu_custom_call.1} parent=1 // pred_fallthru
      _
    %v77 = vld [vmem:[#allocation5] sm:$0xff]
    %v78 = vld [vmem:[#allocation5 + $0x8] sm:$0xff]
    %v79 = vld [vmem:[#allocation5 + $0x10] sm:$0xff]
    %v80 = vld [vmem:[#allocation5 + $0x18] sm:$0xff]
    %v81 = vld [vmem:[#allocation5 + $0x20] sm:$0xff]
    %v82 = vld [vmem:[#allocation5 + $0x28] sm:$0xff]
    %v83 = vld [vmem:[#allocation5 + $0x30] sm:$0xff]
    %v84 = vld [vmem:[#allocation5 + $0x38] sm:$0xff]
    %v85 = vld [vmem:[#allocation5 + $0x40] sm:$0xff]
    %v86 = vld [vmem:[#allocation5 + $0x48] sm:$0xff]
    %v87 = vld [vmem:[#allocation5 + $0x50] sm:$0xff]
    %v88 = vld [vmem:[#allocation5 + $0x58] sm:$0xff]
    %v89 = vld [vmem:[#allocation5 + $0x60] sm:$0xff]
    %v90 = vld [vmem:[#allocation5 + $0x68] sm:$0xff]
    %v91 = vld [vmem:[#allocation5 + $0x70] sm:$0xff]
    %v92 = vld [vmem:[#allocation5 + $0x78] sm:$0xff]
    %v93 = vld [vmem:[#allocation5 + $0x80] sm:$0xff]
    %v94 = vld [vmem:[#allocation5 + $0x88] sm:$0xff]
    %v95 = vld [vmem:[#allocation5 + $0x90] sm:$0xff]
    %v96 = vld [vmem:[#allocation5 + $0x98] sm:$0xff]
    %v97 = vld [vmem:[#allocation5 + $0xa0] sm:$0xff]
    %v98 = vld [vmem:[#allocation5 + $0xa8] sm:$0xff]
    %v99 = vld [vmem:[#allocation5 + $0xb0] sm:$0xff]
    %v100 = vld [vmem:[#allocation5 + $0xb8] sm:$0xff]
    %v101 = vld [vmem:[#allocation5 + $0xc0] sm:$0xff]
    %v102 = vld [vmem:[#allocation5 + $0xc8] sm:$0xff]
    %v103 = vld [vmem:[#allocation5 + $0xd0] sm:$0xff]
    %v104 = vld [vmem:[#allocation5 + $0xd8] sm:$0xff]
    %v105 = vld [vmem:[#allocation5 + $0xe0] sm:$0xff]
    %v106 = vld [vmem:[#allocation5 + $0xe8] sm:$0xff]
    %v107 = vld [vmem:[#allocation5 + $0xf0] sm:$0xff]
    %v108 = vld [vmem:[#allocation5 + $0xf8] sm:$0xff]
    %v109 = vld [vmem:[#allocation5 + $0x100] sm:$0xff]
    %v110 = vld [vmem:[#allocation5 + $0x108] sm:$0xff]
    %v111 = vld [vmem:[#allocation5 + $0x110] sm:$0xff]
    %v112 = vld [vmem:[#allocation5 + $0x118] sm:$0xff]
    %v113 = vld [vmem:[#allocation5 + $0x120] sm:$0xff]
    %v114 = vld [vmem:[#allocation5 + $0x128] sm:$0xff]
    %v115 = vld [vmem:[#allocation5 + $0x130] sm:$0xff]
    %v116 = vld [vmem:[#allocation5 + $0x138] sm:$0xff]
    %v117 = vld [vmem:[#allocation5 + $0x140] sm:$0xff]
    %v118 = vld [vmem:[#allocation5 + $0x148] sm:$0xff]
    %v119 = vld [vmem:[#allocation5 + $0x150] sm:$0xff]
    %v120 = vld [vmem:[#allocation5 + $0x158] sm:$0xff]
    %v121 = vld [vmem:[#allocation5 + $0x160] sm:$0xff]
    %v122 = vld [vmem:[#allocation5 + $0x168] sm:$0xff]
    %v123 = vld [vmem:[#allocation5 + $0x170] sm:$0xff]
    %v124 = vld [vmem:[#allocation5 + $0x178] sm:$0xff]
    %v125 = vld [vmem:[#allocation5 + $0x180] sm:$0xff]
    %v126 = vld [vmem:[#allocation5 + $0x188] sm:$0xff]
    %v127 = vld [vmem:[#allocation5 + $0x190] sm:$0xff]
    %v128 = vld [vmem:[#allocation5 + $0x198] sm:$0xff]
    %v129 = vld [vmem:[#allocation5 + $0x1a0] sm:$0xff]
    %v130 = vld [vmem:[#allocation5 + $0x1a8] sm:$0xff]
    %v131 = vld [vmem:[#allocation5 + $0x1b0] sm:$0xff]
    %v132 = vld [vmem:[#allocation5 + $0x1b8] sm:$0xff]
    %v133 = vld [vmem:[#allocation5 + $0x1c0] sm:$0xff]
    %v134 = vld [vmem:[#allocation5 + $0x1c8] sm:$0xff]
    %v135 = vld [vmem:[#allocation5 + $0x1d0] sm:$0xff]
    %v136 = vld [vmem:[#allocation5 + $0x1d8] sm:$0xff]
    %v137 = vld [vmem:[#allocation5 + $0x1e0] sm:$0xff]
    %v138 = vld [vmem:[#allocation5 + $0x1e8] sm:$0xff]
    %v139 = vld [vmem:[#allocation5 + $0x1f0] sm:$0xff]
    %v140 = vld [vmem:[#allocation5 + $0x1f8] sm:$0xff]
    %v141 = vld [vmem:[#allocation5 + $0x200] sm:$0xff]
    %v142 = vld [vmem:[#allocation5 + $0x208] sm:$0xff]
    %v143 = vld [vmem:[#allocation5 + $0x210] sm:$0xff]
    %v144 = vld [vmem:[#allocation5 + $0x218] sm:$0xff]
    %v145 = vld [vmem:[#allocation5 + $0x220] sm:$0xff]
    %v146 = vld [vmem:[#allocation5 + $0x228] sm:$0xff]
    %v147 = vld [vmem:[#allocation5 + $0x230] sm:$0xff]
    %v148 = vld [vmem:[#allocation5 + $0x238] sm:$0xff]
    %v149 = vld [vmem:[#allocation5 + $0x240] sm:$0xff]
    %v150 = vld [vmem:[#allocation5 + $0x248] sm:$0xff]
    %v151 = vld [vmem:[#allocation5 + $0x250] sm:$0xff]
    %v152 = vld [vmem:[#allocation5 + $0x258] sm:$0xff]
    %v153 = vld [vmem:[#allocation5 + $0x260] sm:$0xff]
    %v154 = vld [vmem:[#allocation5 + $0x268] sm:$0xff]
    %v155 = vld [vmem:[#allocation5 + $0x270] sm:$0xff]
    %v156 = vld [vmem:[#allocation5 + $0x278] sm:$0xff]
    %v157 = vld [vmem:[#allocation5 + $0x280] sm:$0xff]
    %v158 = vld [vmem:[#allocation5 + $0x288] sm:$0xff]
    %v159 = vld [vmem:[#allocation5 + $0x290] sm:$0xff]
    %v160 = vld [vmem:[#allocation5 + $0x298] sm:$0xff]
    %v161 = vld [vmem:[#allocation5 + $0x2a0] sm:$0xff]
    %v162 = vld [vmem:[#allocation5 + $0x2a8] sm:$0xff]
    %v163 = vld [vmem:[#allocation5 + $0x2b0] sm:$0xff]
    %v164 = vld [vmem:[#allocation5 + $0x2b8] sm:$0xff]
    %v165 = vld [vmem:[#allocation5 + $0x2c0] sm:$0xff]
    %v166 = vld [vmem:[#allocation5 + $0x2c8] sm:$0xff]
    %v167 = vld [vmem:[#allocation5 + $0x2d0] sm:$0xff]
    %v168 = vld [vmem:[#allocation5 + $0x2d8] sm:$0xff]
    %v169 = vld [vmem:[#allocation5 + $0x2e0] sm:$0xff]
    %v170 = vld [vmem:[#allocation5 + $0x2e8] sm:$0xff]
    %v171 = vld [vmem:[#allocation5 + $0x2f0] sm:$0xff]
    %v172 = vld [vmem:[#allocation5 + $0x2f8] sm:$0xff]
    %v173 = vld [vmem:[#allocation5 + $0x300] sm:$0xff]
    %v174 = vld [vmem:[#allocation5 + $0x308] sm:$0xff]
    %v175 = vld [vmem:[#allocation5 + $0x310] sm:$0xff]
    %v176 = vld [vmem:[#allocation5 + $0x318] sm:$0xff]
    %v177 = vld [vmem:[#allocation5 + $0x320] sm:$0xff]
    %v178 = vld [vmem:[#allocation5 + $0x328] sm:$0xff]
    %v179 = vld [vmem:[#allocation5 + $0x330] sm:$0xff]
    %v180 = vld [vmem:[#allocation5 + $0x338] sm:$0xff]
    %v181 = vld [vmem:[#allocation5 + $0x340] sm:$0xff]
    %v182 = vld [vmem:[#allocation5 + $0x348] sm:$0xff]
    %v183 = vld [vmem:[#allocation5 + $0x350] sm:$0xff]
    %v184 = vld [vmem:[#allocation5 + $0x358] sm:$0xff]
    %v185 = vld [vmem:[#allocation5 + $0x360] sm:$0xff]
    %v186 = vld [vmem:[#allocation5 + $0x368] sm:$0xff]
    %v187 = vld [vmem:[#allocation5 + $0x370] sm:$0xff]
    %v188 = vld [vmem:[#allocation5 + $0x378] sm:$0xff]
    %v189 = vld [vmem:[#allocation5 + $0x380] sm:$0xff]
    %v190 = vld [vmem:[#allocation5 + $0x388] sm:$0xff]
    %v191 = vld [vmem:[#allocation5 + $0x390] sm:$0xff]
    %v192 = vld [vmem:[#allocation5 + $0x398] sm:$0xff]
    %v193 = vld [vmem:[#allocation5 + $0x3a0] sm:$0xff]
    %v194 = vld [vmem:[#allocation5 + $0x3a8] sm:$0xff]
    %v195 = vld [vmem:[#allocation5 + $0x3b0] sm:$0xff]
    %v196 = vld [vmem:[#allocation5 + $0x3b8] sm:$0xff]
    %v197 = vld [vmem:[#allocation5 + $0x3c0] sm:$0xff]
    %v198 = vld [vmem:[#allocation5 + $0x3c8] sm:$0xff]
    %v199 = vld [vmem:[#allocation5 + $0x3d0] sm:$0xff]
    %v200 = vld [vmem:[#allocation5 + $0x3d8] sm:$0xff]
    %v201 = vld [vmem:[#allocation5 + $0x3e0] sm:$0xff]
    %v202 = vld [vmem:[#allocation5 + $0x3e8] sm:$0xff]
    %v203 = vld [vmem:[#allocation5 + $0x3f0] sm:$0xff]
    %v204 = vld [vmem:[#allocation5 + $0x3f8] sm:$0xff]
    %v205 = vld [vmem:[#allocation5 + $0x400] sm:$0xff]
    %v206 = vld [vmem:[#allocation5 + $0x408] sm:$0xff]
    %v207 = vld [vmem:[#allocation5 + $0x410] sm:$0xff]
    %v208 = vld [vmem:[#allocation5 + $0x418] sm:$0xff]
    %v209 = vld [vmem:[#allocation5 + $0x420] sm:$0xff]
    %v210 = vld [vmem:[#allocation5 + $0x428] sm:$0xff]
    %v211 = vld [vmem:[#allocation5 + $0x430] sm:$0xff]
    %v212 = vld [vmem:[#allocation5 + $0x438] sm:$0xff]
    %v213 = vld [vmem:[#allocation5 + $0x440] sm:$0xff]
    %v214 = vld [vmem:[#allocation5 + $0x448] sm:$0xff]
    %v215 = vld [vmem:[#allocation5 + $0x450] sm:$0xff]
    %v216 = vld [vmem:[#allocation5 + $0x458] sm:$0xff]
    %v217 = vld [vmem:[#allocation5 + $0x460] sm:$0xff]
    %v218 = vld [vmem:[#allocation5 + $0x468] sm:$0xff]
    %v219 = vld [vmem:[#allocation5 + $0x470] sm:$0xff]
    %v220 = vld [vmem:[#allocation5 + $0x478] sm:$0xff]
    %v221 = vld [vmem:[#allocation5 + $0x480] sm:$0xff]
    %v222 = vld [vmem:[#allocation5 + $0x488] sm:$0xff]
    %v223 = vld [vmem:[#allocation5 + $0x490] sm:$0xff]
    %v224 = vld [vmem:[#allocation5 + $0x498] sm:$0xff]
    %v225 = vld [vmem:[#allocation5 + $0x4a0] sm:$0xff]
    %v226 = vld [vmem:[#allocation5 + $0x4a8] sm:$0xff]
    %v227 = vld [vmem:[#allocation5 + $0x4b0] sm:$0xff]
    %v228 = vld [vmem:[#allocation5 + $0x4b8] sm:$0xff]
    %v229 = vld [vmem:[#allocation5 + $0x4c0] sm:$0xff]
    %v230 = vld [vmem:[#allocation5 + $0x4c8] sm:$0xff]
    %v231 = vld [vmem:[#allocation5 + $0x4d0] sm:$0xff]
    %v232 = vld [vmem:[#allocation5 + $0x4d8] sm:$0xff]
    %v233 = vld [vmem:[#allocation5 + $0x4e0] sm:$0xff]
    %v234 = vld [vmem:[#allocation5 + $0x4e8] sm:$0xff]
    %v235 = vld [vmem:[#allocation5 + $0x4f0] sm:$0xff]
    %v236 = vld [vmem:[#allocation5 + $0x4f8] sm:$0xff]
    %v237 = vld [vmem:[#allocation5 + $0x500] sm:$0xff]
    %v238 = vld [vmem:[#allocation5 + $0x508] sm:$0xff]
    %v239 = vld [vmem:[#allocation5 + $0x510] sm:$0xff]
    %v240 = vld [vmem:[#allocation5 + $0x518] sm:$0xff]
    %v241 = vld [vmem:[#allocation5 + $0x520] sm:$0xff]
    %v242 = vld [vmem:[#allocation5 + $0x528] sm:$0xff]
    %v243 = vld [vmem:[#allocation5 + $0x530] sm:$0xff]
    %v244 = vld [vmem:[#allocation5 + $0x538] sm:$0xff]
    %v245 = vld [vmem:[#allocation5 + $0x540] sm:$0xff]
    %v246 = vld [vmem:[#allocation5 + $0x548] sm:$0xff]
    %v247 = vld [vmem:[#allocation5 + $0x550] sm:$0xff]
    %v248 = vld [vmem:[#allocation5 + $0x558] sm:$0xff]
    %v249 = vld [vmem:[#allocation5 + $0x560] sm:$0xff]
    %v250 = vld [vmem:[#allocation5 + $0x568] sm:$0xff]
    %v251 = vld [vmem:[#allocation5 + $0x570] sm:$0xff]
    %v252 = vld [vmem:[#allocation5 + $0x578] sm:$0xff]
    %v253 = vld [vmem:[#allocation8] sm:$0x3]
    %v254 = vld [vmem:[#allocation8 + $0x2] sm:$0x3]
    %v255 = vld [vmem:[#allocation8 + $0x4] sm:$0x3]
    %v256 = vld [vmem:[#allocation8 + $0x6] sm:$0xff]
    %v257 = vld [vmem:[#allocation2] sm:$0xff]
    %v258 = vld [vmem:[#allocation2 + $0x8] sm:$0xff]
    %v259 = vld [vmem:[#allocation2 + $0x10] sm:$0xff]
    %v260 = vld [vmem:[#allocation2 + $0x18] sm:$0xff]
    %v261 = vld [vmem:[#allocation2 + $0x20] sm:$0xff]
    %v262 = vld [vmem:[#allocation2 + $0x28] sm:$0xff]
    %v263 = vld [vmem:[#allocation2 + $0x30] sm:$0xff]
    %v264 = vld [vmem:[#allocation2 + $0x38] sm:$0xff]
    %v265 = vpack.c.bf16 %v257, %v257
    %v266 = vpack.c.bf16 %v258, %v258
    %v267 = vpack.c.bf16 %v259, %v259
    %v268 = vpack.c.bf16 %v260, %v260
    %v269 = vpack.c.bf16 %v261, %v261
    %v270 = vpack.c.bf16 %v262, %v262
    %v271 = vpack.c.bf16 %v263, %v263
    %v272 = vpack.c.bf16 %v264, %v264
    %v274 = vlaneseq
    %v275 = vshrl.u32 %v274, 7
    %v276 = vsub.s32 0, %v275
    %v277 = vrot.slane %v253, %v276
    %v278 = vlaneseq
    %v279 = vshrl.u32 %v278, 7
    %v280 = vsub.s32 1, %v279
    %v281 = vrot.slane %v253, %v280
    %v412 = vunpack.c.l.b16 %v77
    %v413 = vunpack.c.h.b16 %v77
    %v414 = vunpack.c.l.b16 %v78
    %v415 = vunpack.c.h.b16 %v78
    %v416 = vunpack.c.l.b16 %v79
    %v417 = vunpack.c.h.b16 %v79
    %v418 = vunpack.c.l.b16 %v80
    %v419 = vunpack.c.h.b16 %v80
    %v420 = vunpack.c.l.b16 %v81
    %v421 = vunpack.c.h.b16 %v81
    %v422 = vunpack.c.l.b16 %v82
    %v423 = vunpack.c.h.b16 %v82
    %v424 = vunpack.c.l.b16 %v83
    %v425 = vunpack.c.h.b16 %v83
    %v426 = vunpack.c.l.b16 %v84
    %v427 = vunpack.c.h.b16 %v84
    %v428 = vunpack.c.l.b16 %v85
    %v429 = vunpack.c.h.b16 %v85
    %v430 = vunpack.c.l.b16 %v86
    %v431 = vunpack.c.h.b16 %v86
    %v432 = vunpack.c.l.b16 %v87
    %v433 = vunpack.c.h.b16 %v87
    %v434 = vunpack.c.l.b16 %v88
    %v435 = vunpack.c.h.b16 %v88
    %v436 = vunpack.c.l.b16 %v89
    %v437 = vunpack.c.h.b16 %v89
    %v438 = vunpack.c.l.b16 %v90
    %v439 = vunpack.c.h.b16 %v90
    %v440 = vunpack.c.l.b16 %v91
    %v441 = vunpack.c.h.b16 %v91
    %v442 = vunpack.c.l.b16 %v92
    %v443 = vunpack.c.h.b16 %v92
    %v444 = vunpack.c.l.b16 %v93
    %v445 = vunpack.c.h.b16 %v93
    %v446 = vunpack.c.l.b16 %v94
    %v447 = vunpack.c.h.b16 %v94
    %v448 = vunpack.c.l.b16 %v95
    %v449 = vunpack.c.h.b16 %v95
    %v450 = vunpack.c.l.b16 %v96
    %v451 = vunpack.c.h.b16 %v96
    %v452 = vunpack.c.l.b16 %v97
    %v453 = vunpack.c.h.b16 %v97
    %v454 = vunpack.c.l.b16 %v98
    %v455 = vunpack.c.h.b16 %v98
    %v456 = vunpack.c.l.b16 %v99
    %v457 = vunpack.c.h.b16 %v99
    %v458 = vunpack.c.l.b16 %v100
    %v459 = vunpack.c.h.b16 %v100
    %v460 = vunpack.c.l.b16 %v101
    %v461 = vunpack.c.h.b16 %v101
    %v462 = vunpack.c.l.b16 %v102
    %v463 = vunpack.c.h.b16 %v102
    %v464 = vunpack.c.l.b16 %v103
    %v465 = vunpack.c.h.b16 %v103
    %v466 = vunpack.c.l.b16 %v104
    %v467 = vunpack.c.h.b16 %v104
    %v468 = vunpack.c.l.b16 %v105
    %v469 = vunpack.c.h.b16 %v105
    %v470 = vunpack.c.l.b16 %v106
    %v471 = vunpack.c.h.b16 %v106
    %v472 = vunpack.c.l.b16 %v107
    %v473 = vunpack.c.h.b16 %v107
    %v474 = vunpack.c.l.b16 %v108
    %v475 = vunpack.c.h.b16 %v108
    %v476 = vunpack.c.l.b16 %v109
    %v477 = vunpack.c.h.b16 %v109
    %v478 = vunpack.c.l.b16 %v110
    %v479 = vunpack.c.h.b16 %v110
    %v480 = vunpack.c.l.b16 %v111
    %v481 = vunpack.c.h.b16 %v111
    %v482 = vunpack.c.l.b16 %v112
    %v483 = vunpack.c.h.b16 %v112
    %v484 = vunpack.c.l.b16 %v113
    %v485 = vunpack.c.h.b16 %v113
    %v486 = vunpack.c.l.b16 %v114
    %v487 = vunpack.c.h.b16 %v114
    %v488 = vunpack.c.l.b16 %v115
    %v489 = vunpack.c.h.b16 %v115
    %v490 = vunpack.c.l.b16 %v116
    %v491 = vunpack.c.h.b16 %v116
    %v492 = vunpack.c.l.b16 %v117
    %v493 = vunpack.c.h.b16 %v117
    %v494 = vunpack.c.l.b16 %v118
    %v495 = vunpack.c.h.b16 %v118
    %v496 = vunpack.c.l.b16 %v119
    %v497 = vunpack.c.h.b16 %v119
    %v498 = vunpack.c.l.b16 %v120
    %v499 = vunpack.c.h.b16 %v120
    %v500 = vunpack.c.l.b16 %v121
    %v501 = vunpack.c.h.b16 %v121
    %v502 = vunpack.c.l.b16 %v122
    %v503 = vunpack.c.h.b16 %v122
    %v504 = vunpack.c.l.b16 %v123
    %v505 = vunpack.c.h.b16 %v123
    %v506 = vunpack.c.l.b16 %v124
    %v507 = vunpack.c.h.b16 %v124
    %v508 = vunpack.c.l.b16 %v125
    %v509 = vunpack.c.h.b16 %v125
    %v510 = vunpack.c.l.b16 %v126
    %v511 = vunpack.c.h.b16 %v126
    %v512 = vunpack.c.l.b16 %v127
    %v513 = vunpack.c.h.b16 %v127
    %v514 = vunpack.c.l.b16 %v128
    %v515 = vunpack.c.h.b16 %v128
    %v516 = vunpack.c.l.b16 %v129
    %v517 = vunpack.c.h.b16 %v129
    %v518 = vunpack.c.l.b16 %v130
    %v519 = vunpack.c.h.b16 %v130
    %v520 = vunpack.c.l.b16 %v131
    %v521 = vunpack.c.h.b16 %v131
    %v522 = vunpack.c.l.b16 %v132
    %v523 = vunpack.c.h.b16 %v132
    %v524 = vunpack.c.l.b16 %v133
    %v525 = vunpack.c.h.b16 %v133
    %v526 = vunpack.c.l.b16 %v134
    %v527 = vunpack.c.h.b16 %v134
    %v528 = vunpack.c.l.b16 %v135
    %v529 = vunpack.c.h.b16 %v135
    %v530 = vunpack.c.l.b16 %v136
    %v531 = vunpack.c.h.b16 %v136
    %v532 = vunpack.c.l.b16 %v137
    %v533 = vunpack.c.h.b16 %v137
    %v534 = vunpack.c.l.b16 %v138
    %v535 = vunpack.c.h.b16 %v138
    %v536 = vunpack.c.l.b16 %v139
    %v537 = vunpack.c.h.b16 %v139
    %v538 = vunpack.c.l.b16 %v140
    %v539 = vunpack.c.h.b16 %v140
    %v540 = vunpack.c.l.b16 %v141
    %v541 = vunpack.c.h.b16 %v141
    %v542 = vunpack.c.l.b16 %v142
    %v543 = vunpack.c.h.b16 %v142
    %v544 = vunpack.c.l.b16 %v143
    %v545 = vunpack.c.h.b16 %v143
    %v546 = vunpack.c.l.b16 %v144
    %v547 = vunpack.c.h.b16 %v144
    %v548 = vunpack.c.l.b16 %v145
    %v549 = vunpack.c.h.b16 %v145
    %v550 = vunpack.c.l.b16 %v146
    %v551 = vunpack.c.h.b16 %v146
    %v552 = vunpack.c.l.b16 %v147
    %v553 = vunpack.c.h.b16 %v147
    %v554 = vunpack.c.l.b16 %v148
    %v555 = vunpack.c.h.b16 %v148
    %v556 = vunpack.c.l.b16 %v149
    %v557 = vunpack.c.h.b16 %v149
    %v558 = vunpack.c.l.b16 %v150
    %v559 = vunpack.c.h.b16 %v150
    %v560 = vunpack.c.l.b16 %v151
    %v561 = vunpack.c.h.b16 %v151
    %v562 = vunpack.c.l.b16 %v152
    %v563 = vunpack.c.h.b16 %v152
    %v564 = vunpack.c.l.b16 %v153
    %v565 = vunpack.c.h.b16 %v153
    %v566 = vunpack.c.l.b16 %v154
    %v567 = vunpack.c.h.b16 %v154
    %v568 = vunpack.c.l.b16 %v155
    %v569 = vunpack.c.h.b16 %v155
    %v570 = vunpack.c.l.b16 %v156
    %v571 = vunpack.c.h.b16 %v156
    %v572 = vunpack.c.l.b16 %v157
    %v573 = vunpack.c.h.b16 %v157
    %v574 = vunpack.c.l.b16 %v158
    %v575 = vunpack.c.h.b16 %v158
    %v576 = vunpack.c.l.b16 %v159
    %v577 = vunpack.c.h.b16 %v159
    %v578 = vunpack.c.l.b16 %v160
    %v579 = vunpack.c.h.b16 %v160
    %v580 = vunpack.c.l.b16 %v161
    %v581 = vunpack.c.h.b16 %v161
    %v582 = vunpack.c.l.b16 %v162
    %v583 = vunpack.c.h.b16 %v162
    %v584 = vunpack.c.l.b16 %v163
    %v585 = vunpack.c.h.b16 %v163
    %v586 = vunpack.c.l.b16 %v164
    %v587 = vunpack.c.h.b16 %v164
    %v588 = vunpack.c.l.b16 %v165
    %v589 = vunpack.c.h.b16 %v165
    %v590 = vunpack.c.l.b16 %v166
    %v591 = vunpack.c.h.b16 %v166
    %v592 = vunpack.c.l.b16 %v167
    %v593 = vunpack.c.h.b16 %v167
    %v594 = vunpack.c.l.b16 %v168
    %v595 = vunpack.c.h.b16 %v168
    %v596 = vunpack.c.l.b16 %v169
    %v597 = vunpack.c.h.b16 %v169
    %v598 = vunpack.c.l.b16 %v170
    %v599 = vunpack.c.h.b16 %v170
    %v600 = vunpack.c.l.b16 %v171
    %v601 = vunpack.c.h.b16 %v171
    %v602 = vunpack.c.l.b16 %v172
    %v603 = vunpack.c.h.b16 %v172
    %v604 = vunpack.c.l.b16 %v173
    %v605 = vunpack.c.h.b16 %v173
    %v606 = vunpack.c.l.b16 %v174
    %v607 = vunpack.c.h.b16 %v174
    %v608 = vunpack.c.l.b16 %v175
    %v609 = vunpack.c.h.b16 %v175
    %v610 = vunpack.c.l.b16 %v176
    %v611 = vunpack.c.h.b16 %v176
    %v612 = vunpack.c.l.b16 %v177
    %v613 = vunpack.c.h.b16 %v177
    %v614 = vunpack.c.l.b16 %v178
    %v615 = vunpack.c.h.b16 %v178
    %v616 = vunpack.c.l.b16 %v179
    %v617 = vunpack.c.h.b16 %v179
    %v618 = vunpack.c.l.b16 %v180
    %v619 = vunpack.c.h.b16 %v180
    %v620 = vunpack.c.l.b16 %v181
    %v621 = vunpack.c.h.b16 %v181
    %v622 = vunpack.c.l.b16 %v182
    %v623 = vunpack.c.h.b16 %v182
    %v624 = vunpack.c.l.b16 %v183
    %v625 = vunpack.c.h.b16 %v183
    %v626 = vunpack.c.l.b16 %v184
    %v627 = vunpack.c.h.b16 %v184
    %v628 = vunpack.c.l.b16 %v185
    %v629 = vunpack.c.h.b16 %v185
    %v630 = vunpack.c.l.b16 %v186
    %v631 = vunpack.c.h.b16 %v186
    %v632 = vunpack.c.l.b16 %v187
    %v633 = vunpack.c.h.b16 %v187
    %v634 = vunpack.c.l.b16 %v188
    %v635 = vunpack.c.h.b16 %v188
    %v636 = vunpack.c.l.b16 %v189
    %v637 = vunpack.c.h.b16 %v189
    %v638 = vunpack.c.l.b16 %v190
    %v639 = vunpack.c.h.b16 %v190
    %v640 = vunpack.c.l.b16 %v191
    %v641 = vunpack.c.h.b16 %v191
    %v642 = vunpack.c.l.b16 %v192
    %v643 = vunpack.c.h.b16 %v192
    %v644 = vunpack.c.l.b16 %v193
    %v645 = vunpack.c.h.b16 %v193
    %v646 = vunpack.c.l.b16 %v194
    %v647 = vunpack.c.h.b16 %v194
    %v648 = vunpack.c.l.b16 %v195
    %v649 = vunpack.c.h.b16 %v195
    %v650 = vunpack.c.l.b16 %v196
    %v651 = vunpack.c.h.b16 %v196
    %v652 = vunpack.c.l.b16 %v197
    %v653 = vunpack.c.h.b16 %v197
    %v654 = vunpack.c.l.b16 %v198
    %v655 = vunpack.c.h.b16 %v198
    %v656 = vunpack.c.l.b16 %v199
    %v657 = vunpack.c.h.b16 %v199
    %v658 = vunpack.c.l.b16 %v200
    %v659 = vunpack.c.h.b16 %v200
    %v660 = vunpack.c.l.b16 %v201
    %v661 = vunpack.c.h.b16 %v201
    %v662 = vunpack.c.l.b16 %v202
    %v663 = vunpack.c.h.b16 %v202
    %v664 = vunpack.c.l.b16 %v203
    %v665 = vunpack.c.h.b16 %v203
    %v666 = vunpack.c.l.b16 %v204
    %v667 = vunpack.c.h.b16 %v204
    %v668 = vpack.c.b16 %v414, %v412
    %v669 = vpack.c.b16 %v415, %v413
    %v670 = vpack.c.b16 %v418, %v416
    %v671 = vpack.c.b16 %v419, %v417
    %v672 = vpack.c.b16 %v422, %v420
    %v673 = vpack.c.b16 %v423, %v421
    %v674 = vpack.c.b16 %v426, %v424
    %v675 = vpack.c.b16 %v427, %v425
    %v676 = vpack.c.b16 %v430, %v428
    %v677 = vpack.c.b16 %v431, %v429
    %v678 = vpack.c.b16 %v434, %v432
    %v679 = vpack.c.b16 %v435, %v433
    %v680 = vpack.c.b16 %v438, %v436
    %v681 = vpack.c.b16 %v439, %v437
    %v682 = vpack.c.b16 %v442, %v440
    %v683 = vpack.c.b16 %v443, %v441
    %v684 = vpack.c.b16 %v446, %v444
    %v685 = vpack.c.b16 %v447, %v445
    %v686 = vpack.c.b16 %v450, %v448
    %v687 = vpack.c.b16 %v451, %v449
    %v688 = vpack.c.b16 %v454, %v452
    %v689 = vpack.c.b16 %v455, %v453
    %v690 = vpack.c.b16 %v458, %v456
    %v691 = vpack.c.b16 %v459, %v457
    %v692 = vpack.c.b16 %v462, %v460
    %v693 = vpack.c.b16 %v463, %v461
    %v694 = vpack.c.b16 %v466, %v464
    %v695 = vpack.c.b16 %v467, %v465
    %v696 = vpack.c.b16 %v470, %v468
    %v697 = vpack.c.b16 %v471, %v469
    %v698 = vpack.c.b16 %v474, %v472
    %v699 = vpack.c.b16 %v475, %v473
    %v700 = vpack.c.b16 %v478, %v476
    %v701 = vpack.c.b16 %v479, %v477
    %v702 = vpack.c.b16 %v482, %v480
    %v703 = vpack.c.b16 %v483, %v481
    %v704 = vpack.c.b16 %v486, %v484
    %v705 = vpack.c.b16 %v487, %v485
    %v706 = vpack.c.b16 %v490, %v488
    %v707 = vpack.c.b16 %v491, %v489
    %v708 = vpack.c.b16 %v494, %v492
    %v709 = vpack.c.b16 %v495, %v493
    %v710 = vpack.c.b16 %v498, %v496
    %v711 = vpack.c.b16 %v499, %v497
    %v712 = vpack.c.b16 %v502, %v500
    %v713 = vpack.c.b16 %v503, %v501
    %v714 = vpack.c.b16 %v506, %v504
    %v715 = vpack.c.b16 %v507, %v505
    %v716 = vpack.c.b16 %v510, %v508
    %v717 = vpack.c.b16 %v511, %v509
    %v718 = vpack.c.b16 %v514, %v512
    %v719 = vpack.c.b16 %v515, %v513
    %v720 = vpack.c.b16 %v518, %v516
    %v721 = vpack.c.b16 %v519, %v517
    %v722 = vpack.c.b16 %v522, %v520
    %v723 = vpack.c.b16 %v523, %v521
    %v724 = vpack.c.b16 %v526, %v524
    %v725 = vpack.c.b16 %v527, %v525
    %v726 = vpack.c.b16 %v530, %v528
    %v727 = vpack.c.b16 %v531, %v529
    %v728 = vpack.c.b16 %v534, %v532
    %v729 = vpack.c.b16 %v535, %v533
    %v730 = vpack.c.b16 %v538, %v536
    %v731 = vpack.c.b16 %v539, %v537
    %v732 = vpack.c.b16 %v542, %v540
    %v733 = vpack.c.b16 %v543, %v541
    %v734 = vpack.c.b16 %v546, %v544
    %v735 = vpack.c.b16 %v547, %v545
    %v736 = vpack.c.b16 %v550, %v548
    %v737 = vpack.c.b16 %v551, %v549
    %v738 = vpack.c.b16 %v554, %v552
    %v739 = vpack.c.b16 %v555, %v553
    %v740 = vpack.c.b16 %v558, %v556
    %v741 = vpack.c.b16 %v559, %v557
    %v742 = vpack.c.b16 %v562, %v560
    %v743 = vpack.c.b16 %v563, %v561
    %v744 = vpack.c.b16 %v566, %v564
    %v745 = vpack.c.b16 %v567, %v565
    %v746 = vpack.c.b16 %v570, %v568
    %v747 = vpack.c.b16 %v571, %v569
    %v748 = vpack.c.b16 %v574, %v572
    %v749 = vpack.c.b16 %v575, %v573
    %v750 = vpack.c.b16 %v578, %v576
    %v751 = vpack.c.b16 %v579, %v577
    %v752 = vpack.c.b16 %v582, %v580
    %v753 = vpack.c.b16 %v583, %v581
    %v754 = vpack.c.b16 %v586, %v584
    %v755 = vpack.c.b16 %v587, %v585
    %v756 = vpack.c.b16 %v590, %v588
    %v757 = vpack.c.b16 %v591, %v589
    %v758 = vpack.c.b16 %v594, %v592
    %v759 = vpack.c.b16 %v595, %v593
    %v760 = vpack.c.b16 %v598, %v596
    %v761 = vpack.c.b16 %v599, %v597
    %v762 = vpack.c.b16 %v602, %v600
    %v763 = vpack.c.b16 %v603, %v601
    %v764 = vpack.c.b16 %v606, %v604
    %v765 = vpack.c.b16 %v607, %v605
    %v766 = vpack.c.b16 %v610, %v608
    %v767 = vpack.c.b16 %v611, %v609
    %v768 = vpack.c.b16 %v614, %v612
    %v769 = vpack.c.b16 %v615, %v613
    %v770 = vpack.c.b16 %v618, %v616
    %v771 = vpack.c.b16 %v619, %v617
    %v772 = vpack.c.b16 %v622, %v620
    %v773 = vpack.c.b16 %v623, %v621
    %v774 = vpack.c.b16 %v626, %v624
    %v775 = vpack.c.b16 %v627, %v625
    %v776 = vpack.c.b16 %v630, %v628
    %v777 = vpack.c.b16 %v631, %v629
    %v778 = vpack.c.b16 %v634, %v632
    %v779 = vpack.c.b16 %v635, %v633
    %v780 = vpack.c.b16 %v638, %v636
    %v781 = vpack.c.b16 %v639, %v637
    %v782 = vpack.c.b16 %v642, %v640
    %v783 = vpack.c.b16 %v643, %v641
    %v784 = vpack.c.b16 %v646, %v644
    %v785 = vpack.c.b16 %v647, %v645
    %v786 = vpack.c.b16 %v650, %v648
    %v787 = vpack.c.b16 %v651, %v649
    %v788 = vpack.c.b16 %v654, %v652
    %v789 = vpack.c.b16 %v655, %v653
    %v790 = vpack.c.b16 %v658, %v656
    %v791 = vpack.c.b16 %v659, %v657
    %v792 = vpack.c.b16 %v662, %v660
    %v793 = vpack.c.b16 %v663, %v661
    %v794 = vpack.c.b16 %v666, %v664
    %v795 = vpack.c.b16 %v667, %v665
    %924 = vmatprep.subr.bf16.mxu0 %v669
    %925 = vmatpush1.bf16.msra.mxu0 %v668
    %926 = vmatprep.subr.bf16.mxu0 %v671
    %927 = vmatpush1.bf16.msra.mxu0 %v670
    %928 = vmatprep.subr.bf16.mxu0 %v673
    %929 = vmatpush1.bf16.msra.mxu0 %v672
    %930 = vmatprep.subr.bf16.mxu0 %v675
    %931 = vmatpush1.bf16.msra.mxu0 %v674
    %932 = vmatprep.subr.bf16.mxu0 %v677
    %933 = vmatpush1.bf16.msra.mxu0 %v676
    %934 = vmatprep.subr.bf16.mxu0 %v679
    %935 = vmatpush1.bf16.msra.mxu0 %v678
    %936 = vmatprep.subr.bf16.mxu0 %v681
    %937 = vmatpush1.bf16.msra.mxu0 %v680
    %938 = vmatprep.subr.bf16.mxu0 %v683
    %939 = vmatpush1.bf16.msra.mxu0 %v682
    %940 = vmatprep.subr.bf16.mxu0 %v685
    %941 = vmatpush1.bf16.msra.mxu0 %v684
    %942 = vmatprep.subr.bf16.mxu0 %v687
    %943 = vmatpush1.bf16.msra.mxu0 %v686
    %944 = vmatprep.subr.bf16.mxu0 %v689
    %945 = vmatpush1.bf16.msra.mxu0 %v688
    %946 = vmatprep.subr.bf16.mxu0 %v691
    %947 = vmatpush1.bf16.msra.mxu0 %v690
    %948 = vmatprep.subr.bf16.mxu0 %v693
    %949 = vmatpush1.bf16.msra.mxu0 %v692
    %950 = vmatprep.subr.bf16.mxu0 %v695
    %951 = vmatpush1.bf16.msra.mxu0 %v694
    %952 = vmatprep.subr.bf16.mxu0 %v697
    %953 = vmatpush1.bf16.msra.mxu0 %v696
    %954 = vmatprep.subr.bf16.mxu0 %v699
    %955 = vmatpush1.bf16.msra.mxu0 %v698
    %956 = vmatprep.mubr.bf16.mxu0 %v266
    %957 = vmatmul.mubr.bf16.gmra.mrb[0].mxu0 %v265
    %v958 = vpop.f32.mrb[0].mxu0
    %v959 = vadd.f32 %v277, %v958
    %v960 = vpop.f32.mrb[0].mxu0
    %v961 = vadd.f32 %v281, %v960
    %v962 = vpop.f32.mrb[0].mxu0
    %v963 = vpop.f32.mrb[0].mxu0
    %964 = vdwg.mxu0
    %965 = vmatprep.subr.bf16.mxu0 %v701
    %966 = vmatpush1.bf16.msra.mxu0 %v700
    %967 = vmatprep.subr.bf16.mxu0 %v703
    %968 = vmatpush1.bf16.msra.mxu0 %v702
    %969 = vmatprep.subr.bf16.mxu0 %v705
    %970 = vmatpush1.bf16.msra.mxu0 %v704
    %971 = vmatprep.subr.bf16.mxu0 %v707
    %972 = vmatpush1.bf16.msra.mxu0 %v706
    %973 = vmatprep.subr.bf16.mxu0 %v709
    %974 = vmatpush1.bf16.msra.mxu0 %v708
    %975 = vmatprep.subr.bf16.mxu0 %v711
    %976 = vmatpush1.bf16.msra.mxu0 %v710
    %977 = vmatprep.subr.bf16.mxu0 %v713
    %978 = vmatpush1.bf16.msra.mxu0 %v712
    %979 = vmatprep.subr.bf16.mxu0 %v715
    %980 = vmatpush1.bf16.msra.mxu0 %v714
    %981 = vmatprep.subr.bf16.mxu0 %v717
    %982 = vmatpush1.bf16.msra.mxu0 %v716
    %983 = vmatprep.subr.bf16.mxu0 %v719
    %984 = vmatpush1.bf16.msra.mxu0 %v718
    %985 = vmatprep.subr.bf16.mxu0 %v721
    %986 = vmatpush1.bf16.msra.mxu0 %v720
    %987 = vmatprep.subr.bf16.mxu0 %v723
    %988 = vmatpush1.bf16.msra.mxu0 %v722
    %989 = vmatprep.subr.bf16.mxu0 %v725
    %990 = vmatpush1.bf16.msra.mxu0 %v724
    %991 = vmatprep.subr.bf16.mxu0 %v727
    %992 = vmatpush1.bf16.msra.mxu0 %v726
    %993 = vmatprep.subr.bf16.mxu0 %v729
    %994 = vmatpush1.bf16.msra.mxu0 %v728
    %995 = vmatprep.subr.bf16.mxu0 %v731
    %996 = vmatpush1.bf16.msra.mxu0 %v730
    %997 = vmatprep.mubr.bf16.mxu0 %v268
    %998 = vmatmul.mubr.bf16.gmra.mrb[0].mxu0 %v267
    %v999 = vpop.f32.mrb[0].mxu0
    %v1000 = vadd.f32 %v959, %v999
    %v1001 = vpop.f32.mrb[0].mxu0
    %v1002 = vadd.f32 %v961, %v1001
    %v1003 = vpop.f32.mrb[0].mxu0
    %v1004 = vpop.f32.mrb[0].mxu0
    %1005 = vdwg.mxu0
    %1006 = vmatprep.subr.bf16.mxu0 %v733
    %1007 = vmatpush1.bf16.msra.mxu0 %v732
    %1008 = vmatprep.subr.bf16.mxu0 %v735
    %1009 = vmatpush1.bf16.msra.mxu0 %v734
    %1010 = vmatprep.subr.bf16.mxu0 %v737
    %1011 = vmatpush1.bf16.msra.mxu0 %v736
    %1012 = vmatprep.subr.bf16.mxu0 %v739
    %1013 = vmatpush1.bf16.msra.mxu0 %v738
    %1014 = vmatprep.subr.bf16.mxu0 %v741
    %1015 = vmatpush1.bf16.msra.mxu0 %v740
    %1016 = vmatprep.subr.bf16.mxu0 %v743
    %1017 = vmatpush1.bf16.msra.mxu0 %v742
    %1018 = vmatprep.subr.bf16.mxu0 %v745
    %1019 = vmatpush1.bf16.msra.mxu0 %v744
    %1020 = vmatprep.subr.bf16.mxu0 %v747
    %1021 = vmatpush1.bf16.msra.mxu0 %v746
    %1022 = vmatprep.subr.bf16.mxu0 %v749
    %1023 = vmatpush1.bf16.msra.mxu0 %v748
    %1024 = vmatprep.subr.bf16.mxu0 %v751
    %1025 = vmatpush1.bf16.msra.mxu0 %v750
    %1026 = vmatprep.subr.bf16.mxu0 %v753
    %1027 = vmatpush1.bf16.msra.mxu0 %v752
    %1028 = vmatprep.subr.bf16.mxu0 %v755
    %1029 = vmatpush1.bf16.msra.mxu0 %v754
    %1030 = vmatprep.subr.bf16.mxu0 %v757
    %1031 = vmatpush1.bf16.msra.mxu0 %v756
    %1032 = vmatprep.subr.bf16.mxu0 %v759
    %1033 = vmatpush1.bf16.msra.mxu0 %v758
    %1034 = vmatprep.subr.bf16.mxu0 %v761
    %1035 = vmatpush1.bf16.msra.mxu0 %v760
    %1036 = vmatprep.subr.bf16.mxu0 %v763
    %1037 = vmatpush1.bf16.msra.mxu0 %v762
    %1038 = vmatprep.mubr.bf16.mxu0 %v270
    %1039 = vmatmul.mubr.bf16.gmra.mrb[0].mxu0 %v269
    %v1040 = vpop.f32.mrb[0].mxu0
    %v1041 = vadd.f32 %v1000, %v1040
    %v1042 = vpop.f32.mrb[0].mxu0
    %v1043 = vadd.f32 %v1002, %v1042
    %v1044 = vpop.f32.mrb[0].mxu0
    %v1045 = vpop.f32.mrb[0].mxu0
    %1046 = vdwg.mxu0
    %1047 = vmatprep.subr.bf16.mxu0 %v765
    %1048 = vmatpush1.bf16.msra.mxu0 %v764
    %1049 = vmatprep.subr.bf16.mxu0 %v767
    %1050 = vmatpush1.bf16.msra.mxu0 %v766
    %1051 = vmatprep.subr.bf16.mxu0 %v769
    %1052 = vmatpush1.bf16.msra.mxu0 %v768
    %1053 = vmatprep.subr.bf16.mxu0 %v771
    %1054 = vmatpush1.bf16.msra.mxu0 %v770
    %1055 = vmatprep.subr.bf16.mxu0 %v773
    %1056 = vmatpush1.bf16.msra.mxu0 %v772
    %1057 = vmatprep.subr.bf16.mxu0 %v775
    %1058 = vmatpush1.bf16.msra.mxu0 %v774
    %1059 = vmatprep.subr.bf16.mxu0 %v777
    %1060 = vmatpush1.bf16.msra.mxu0 %v776
    %1061 = vmatprep.subr.bf16.mxu0 %v779
    %1062 = vmatpush1.bf16.msra.mxu0 %v778
    %1063 = vmatprep.subr.bf16.mxu0 %v781
    %1064 = vmatpush1.bf16.msra.mxu0 %v780
    %1065 = vmatprep.subr.bf16.mxu0 %v783
    %1066 = vmatpush1.bf16.msra.mxu0 %v782
    %1067 = vmatprep.subr.bf16.mxu0 %v785
    %1068 = vmatpush1.bf16.msra.mxu0 %v784
    %1069 = vmatprep.subr.bf16.mxu0 %v787
    %1070 = vmatpush1.bf16.msra.mxu0 %v786
    %1071 = vmatprep.subr.bf16.mxu0 %v789
    %1072 = vmatpush1.bf16.msra.mxu0 %v788
    %1073 = vmatprep.subr.bf16.mxu0 %v791
    %1074 = vmatpush1.bf16.msra.mxu0 %v790
    %1075 = vmatprep.subr.bf16.mxu0 %v793
    %1076 = vmatpush1.bf16.msra.mxu0 %v792
    %1077 = vmatprep.subr.bf16.mxu0 %v795
    %1078 = vmatpush1.bf16.msra.mxu0 %v794
    %1079 = vmatprep.mubr.bf16.mxu0 %v272
    %1080 = vmatmul.mubr.bf16.gmra.mrb[0].mxu0 %v271
    %v1081 = vpop.f32.mrb[0].mxu0
    %v1082 = vadd.f32 %v1041, %v1081
    %v1083 = vpop.f32.mrb[0].mxu0
    %v1084 = vadd.f32 %v1043, %v1083
    %v1085 = vpop.f32.mrb[0].mxu0
    %v1086 = vpop.f32.mrb[0].mxu0
    %1087 = vdwg.mxu0
    %v1088 = vmax.f32 %v1082, 0.0
    %v1089 = vmax.f32 %v1084, 0.0
    %v1090 = vpack.c.bf16 %v1088, %v1088
    %v1091 = vpack.c.bf16 %v1089, %v1089
    %v1093 = vlaneseq
    %v1094 = vshrl.u32 %v1093, 7
    %v1095 = vsub.s32 0, %v1094
    %v1096 = vrot.slane %v254, %v1095
    %v1097 = vlaneseq
    %v1098 = vshrl.u32 %v1097, 7
    %v1099 = vsub.s32 1, %v1098
    %v1100 = vrot.slane %v254, %v1099
    %v1135 = vunpack.c.l.b16 %v205
    %v1136 = vunpack.c.h.b16 %v205
    %v1137 = vunpack.c.l.b16 %v206
    %v1138 = vunpack.c.h.b16 %v206
    %v1139 = vunpack.c.l.b16 %v207
    %v1140 = vunpack.c.h.b16 %v207
    %v1141 = vunpack.c.l.b16 %v208
    %v1142 = vunpack.c.h.b16 %v208
    %v1143 = vunpack.c.l.b16 %v209
    %v1144 = vunpack.c.h.b16 %v209
    %v1145 = vunpack.c.l.b16 %v210
    %v1146 = vunpack.c.h.b16 %v210
    %v1147 = vunpack.c.l.b16 %v211
    %v1148 = vunpack.c.h.b16 %v211
    %v1149 = vunpack.c.l.b16 %v212
    %v1150 = vunpack.c.h.b16 %v212
    %v1151 = vunpack.c.l.b16 %v213
    %v1152 = vunpack.c.h.b16 %v213
    %v1153 = vunpack.c.l.b16 %v214
    %v1154 = vunpack.c.h.b16 %v214
    %v1155 = vunpack.c.l.b16 %v215
    %v1156 = vunpack.c.h.b16 %v215
    %v1157 = vunpack.c.l.b16 %v216
    %v1158 = vunpack.c.h.b16 %v216
    %v1159 = vunpack.c.l.b16 %v217
    %v1160 = vunpack.c.h.b16 %v217
    %v1161 = vunpack.c.l.b16 %v218
    %v1162 = vunpack.c.h.b16 %v218
    %v1163 = vunpack.c.l.b16 %v219
    %v1164 = vunpack.c.h.b16 %v219
    %v1165 = vunpack.c.l.b16 %v220
    %v1166 = vunpack.c.h.b16 %v220
    %v1167 = vunpack.c.l.b16 %v221
    %v1168 = vunpack.c.h.b16 %v221
    %v1169 = vunpack.c.l.b16 %v222
    %v1170 = vunpack.c.h.b16 %v222
    %v1171 = vunpack.c.l.b16 %v223
    %v1172 = vunpack.c.h.b16 %v223
    %v1173 = vunpack.c.l.b16 %v224
    %v1174 = vunpack.c.h.b16 %v224
    %v1175 = vunpack.c.l.b16 %v225
    %v1176 = vunpack.c.h.b16 %v225
    %v1177 = vunpack.c.l.b16 %v226
    %v1178 = vunpack.c.h.b16 %v226
    %v1179 = vunpack.c.l.b16 %v227
    %v1180 = vunpack.c.h.b16 %v227
    %v1181 = vunpack.c.l.b16 %v228
    %v1182 = vunpack.c.h.b16 %v228
    %v1183 = vunpack.c.l.b16 %v229
    %v1184 = vunpack.c.h.b16 %v229
    %v1185 = vunpack.c.l.b16 %v230
    %v1186 = vunpack.c.h.b16 %v230
    %v1187 = vunpack.c.l.b16 %v231
    %v1188 = vunpack.c.h.b16 %v231
    %v1189 = vunpack.c.l.b16 %v232
    %v1190 = vunpack.c.h.b16 %v232
    %v1191 = vunpack.c.l.b16 %v233
    %v1192 = vunpack.c.h.b16 %v233
    %v1193 = vunpack.c.l.b16 %v234
    %v1194 = vunpack.c.h.b16 %v234
    %v1195 = vunpack.c.l.b16 %v235
    %v1196 = vunpack.c.h.b16 %v235
    %v1197 = vunpack.c.l.b16 %v236
    %v1198 = vunpack.c.h.b16 %v236
    %v1199 = vpack.c.b16 %v1137, %v1135
    %v1200 = vpack.c.b16 %v1138, %v1136
    %v1201 = vpack.c.b16 %v1141, %v1139
    %v1202 = vpack.c.b16 %v1142, %v1140
    %v1203 = vpack.c.b16 %v1145, %v1143
    %v1204 = vpack.c.b16 %v1146, %v1144
    %v1205 = vpack.c.b16 %v1149, %v1147
    %v1206 = vpack.c.b16 %v1150, %v1148
    %v1207 = vpack.c.b16 %v1153, %v1151
    %v1208 = vpack.c.b16 %v1154, %v1152
    %v1209 = vpack.c.b16 %v1157, %v1155
    %v1210 = vpack.c.b16 %v1158, %v1156
    %v1211 = vpack.c.b16 %v1161, %v1159
    %v1212 = vpack.c.b16 %v1162, %v1160
    %v1213 = vpack.c.b16 %v1165, %v1163
    %v1214 = vpack.c.b16 %v1166, %v1164
    %v1215 = vpack.c.b16 %v1169, %v1167
    %v1216 = vpack.c.b16 %v1170, %v1168
    %v1217 = vpack.c.b16 %v1173, %v1171
    %v1218 = vpack.c.b16 %v1174, %v1172
    %v1219 = vpack.c.b16 %v1177, %v1175
    %v1220 = vpack.c.b16 %v1178, %v1176
    %v1221 = vpack.c.b16 %v1181, %v1179
    %v1222 = vpack.c.b16 %v1182, %v1180
    %v1223 = vpack.c.b16 %v1185, %v1183
    %v1224 = vpack.c.b16 %v1186, %v1184
    %v1225 = vpack.c.b16 %v1189, %v1187
    %v1226 = vpack.c.b16 %v1190, %v1188
    %v1227 = vpack.c.b16 %v1193, %v1191
    %v1228 = vpack.c.b16 %v1194, %v1192
    %v1229 = vpack.c.b16 %v1197, %v1195
    %v1230 = vpack.c.b16 %v1198, %v1196
    %1263 = vmatprep.subr.bf16.mxu0 %v1200
    %1264 = vmatpush1.bf16.msra.mxu0 %v1199
    %1265 = vmatprep.subr.bf16.mxu0 %v1202
    %1266 = vmatpush1.bf16.msra.mxu0 %v1201
    %1267 = vmatprep.subr.bf16.mxu0 %v1204
    %1268 = vmatpush1.bf16.msra.mxu0 %v1203
    %1269 = vmatprep.subr.bf16.mxu0 %v1206
    %1270 = vmatpush1.bf16.msra.mxu0 %v1205
    %1271 = vmatprep.subr.bf16.mxu0 %v1208
    %1272 = vmatpush1.bf16.msra.mxu0 %v1207
    %1273 = vmatprep.subr.bf16.mxu0 %v1210
    %1274 = vmatpush1.bf16.msra.mxu0 %v1209
    %1275 = vmatprep.subr.bf16.mxu0 %v1212
    %1276 = vmatpush1.bf16.msra.mxu0 %v1211
    %1277 = vmatprep.subr.bf16.mxu0 %v1214
    %1278 = vmatpush1.bf16.msra.mxu0 %v1213
    %1279 = vmatprep.subr.bf16.mxu0 %v1216
    %1280 = vmatpush1.bf16.msra.mxu0 %v1215
    %1281 = vmatprep.subr.bf16.mxu0 %v1218
    %1282 = vmatpush1.bf16.msra.mxu0 %v1217
    %1283 = vmatprep.subr.bf16.mxu0 %v1220
    %1284 = vmatpush1.bf16.msra.mxu0 %v1219
    %1285 = vmatprep.subr.bf16.mxu0 %v1222
    %1286 = vmatpush1.bf16.msra.mxu0 %v1221
    %1287 = vmatprep.subr.bf16.mxu0 %v1224
    %1288 = vmatpush1.bf16.msra.mxu0 %v1223
    %1289 = vmatprep.subr.bf16.mxu0 %v1226
    %1290 = vmatpush1.bf16.msra.mxu0 %v1225
    %1291 = vmatprep.subr.bf16.mxu0 %v1228
    %1292 = vmatpush1.bf16.msra.mxu0 %v1227
    %1293 = vmatprep.subr.bf16.mxu0 %v1230
    %1294 = vmatpush1.bf16.msra.mxu0 %v1229
    %1295 = vmatprep.mubr.bf16.mxu0 %v1091
    %1296 = vmatmul.mubr.bf16.gmra.mrb[0].mxu0 %v1090
    %v1297 = vpop.f32.mrb[0].mxu0
    %v1298 = vadd.f32 %v1096, %v1297
    %v1299 = vpop.f32.mrb[0].mxu0
    %v1300 = vadd.f32 %v1100, %v1299
    %v1301 = vpop.f32.mrb[0].mxu0
    %v1302 = vpop.f32.mrb[0].mxu0
    %1303 = vdwg.mxu0
    %v1304 = vld [vmem:[%s4] sm:$0xff]
    %v1305 = vmul.f32 %v1300, 0.5
    %v1306 = vmul.f32 %v1305, 1.442695
    %v1307 = vpow.pop %v1306
    %v1308 = vmul.f32 %v1304, %v1307
    %v1309 = vadd.f32 %v1308, %v1298
    %v1310 = vpack.c.bf16 %v1309, %v1309
    %v1312 = vlaneseq
    %v1313 = vshrl.u32 %v1312, 7
    %v1314 = vsub.s32 0, %v1313
    %v1315 = vrot.slane %v255, %v1314
    %v1316 = vlaneseq
    %v1317 = vshrl.u32 %v1316, 7
    %v1318 = vsub.s32 1, %v1317
    %v1319 = vrot.slane %v255, %v1318
    %v1338 = vunpack.c.l.b16 %v237
    %v1339 = vunpack.c.h.b16 %v237
    %v1340 = vunpack.c.l.b16 %v238
    %v1341 = vunpack.c.h.b16 %v238
    %v1342 = vunpack.c.l.b16 %v239
    %v1343 = vunpack.c.h.b16 %v239
    %v1344 = vunpack.c.l.b16 %v240
    %v1345 = vunpack.c.h.b16 %v240
    %v1346 = vunpack.c.l.b16 %v241
    %v1347 = vunpack.c.h.b16 %v241
    %v1348 = vunpack.c.l.b16 %v242
    %v1349 = vunpack.c.h.b16 %v242
    %v1350 = vunpack.c.l.b16 %v243
    %v1351 = vunpack.c.h.b16 %v243
    %v1352 = vunpack.c.l.b16 %v244
    %v1353 = vunpack.c.h.b16 %v244
    %v1354 = vunpack.c.l.b16 %v245
    %v1355 = vunpack.c.h.b16 %v245
    %v1356 = vunpack.c.l.b16 %v246
    %v1357 = vunpack.c.h.b16 %v246
    %v1358 = vunpack.c.l.b16 %v247
    %v1359 = vunpack.c.h.b16 %v247
    %v1360 = vunpack.c.l.b16 %v248
    %v1361 = vunpack.c.h.b16 %v248
    %v1362 = vunpack.c.l.b16 %v249
    %v1363 = vunpack.c.h.b16 %v249
    %v1364 = vunpack.c.l.b16 %v250
    %v1365 = vunpack.c.h.b16 %v250
    %v1366 = vunpack.c.l.b16 %v251
    %v1367 = vunpack.c.h.b16 %v251
    %v1368 = vunpack.c.l.b16 %v252
    %v1369 = vunpack.c.h.b16 %v252
    %v1370 = vpack.c.b16 %v1340, %v1338
    %v1371 = vpack.c.b16 %v1341, %v1339
    %v1372 = vpack.c.b16 %v1344, %v1342
    %v1373 = vpack.c.b16 %v1345, %v1343
    %v1374 = vpack.c.b16 %v1348, %v1346
    %v1375 = vpack.c.b16 %v1349, %v1347
    %v1376 = vpack.c.b16 %v1352, %v1350
    %v1377 = vpack.c.b16 %v1353, %v1351
    %v1378 = vpack.c.b16 %v1356, %v1354
    %v1379 = vpack.c.b16 %v1357, %v1355
    %v1380 = vpack.c.b16 %v1360, %v1358
    %v1381 = vpack.c.b16 %v1361, %v1359
    %v1382 = vpack.c.b16 %v1364, %v1362
    %v1383 = vpack.c.b16 %v1365, %v1363
    %v1384 = vpack.c.b16 %v1368, %v1366
    %v1385 = vpack.c.b16 %v1369, %v1367
    %1402 = vmatprep.subr.bf16.mxu0 %v1371
    %1403 = vmatpush1.bf16.msra.mxu0 %v1370
    %1404 = vmatprep.subr.bf16.mxu0 %v1373
    %1405 = vmatpush1.bf16.msra.mxu0 %v1372
    %1406 = vmatprep.subr.bf16.mxu0 %v1375
    %1407 = vmatpush1.bf16.msra.mxu0 %v1374
    %1408 = vmatprep.subr.bf16.mxu0 %v1377
    %1409 = vmatpush1.bf16.msra.mxu0 %v1376
    %1410 = vmatprep.subr.bf16.mxu0 %v1379
    %1411 = vmatpush1.bf16.msra.mxu0 %v1378
    %1412 = vmatprep.subr.bf16.mxu0 %v1381
    %1413 = vmatpush1.bf16.msra.mxu0 %v1380
    %1414 = vmatprep.subr.bf16.mxu0 %v1383
    %1415 = vmatpush1.bf16.msra.mxu0 %v1382
    %1416 = vmatprep.subr.bf16.mxu0 %v1385
    %1417 = vmatpush1.bf16.msra.mxu0 %v1384
    %1418 = vmatprep.subr.bf16.mxu0 0
    %1419 = vmatpush1.bf16.msra.mxu0 0
    %1420 = vmatprep.subr.bf16.mxu0 0
    %1421 = vmatpush1.bf16.msra.mxu0 0
    %1422 = vmatprep.subr.bf16.mxu0 0
    %1423 = vmatpush1.bf16.msra.mxu0 0
    %1424 = vmatprep.subr.bf16.mxu0 0
    %1425 = vmatpush1.bf16.msra.mxu0 0
    %1426 = vmatprep.subr.bf16.mxu0 0
    %1427 = vmatpush1.bf16.msra.mxu0 0
    %1428 = vmatprep.subr.bf16.mxu0 0
    %1429 = vmatpush1.bf16.msra.mxu0 0
    %1430 = vmatprep.subr.bf16.mxu0 0
    %1431 = vmatpush1.bf16.msra.mxu0 0
    %1432 = vmatprep.subr.bf16.mxu0 0
    %1433 = vmatpush1.bf16.msra.mxu0 0
    %1434 = vmatprep.mubr.bf16.mxu0 0
    %1435 = vmatmul.mubr.bf16.gmra.mrb[0].mxu0 %v1310
    %v1436 = vpop.f32.mrb[0].mxu0
    %v1437 = vadd.f32 %v1315, %v1436
    %v1438 = vpop.f32.mrb[0].mxu0
    %v1439 = vadd.f32 %v1319, %v1438
    %v1440 = vpop.f32.mrb[0].mxu0
    %v1441 = vpop.f32.mrb[0].mxu0
    %1442 = vdwg.mxu0
    %v1443 = vmax.f32 %v1437, 0.0
    %v1444 = vmax.f32 %v1439, 0.0
    %v1445 = vpack.c.bf16 %v1443, %v1443
    %v1446 = vpack.c.bf16 %v1444, %v1444
    %v1447 = vld [vmem:[#allocation7] sm:$0xff]
    %v1448 = vld [vmem:[#allocation7 + $0x8] sm:$0xff]
    %v1449 = vld [vmem:[#allocation7 + $0x10] sm:$0xff]
    %v1450 = vld [vmem:[#allocation7 + $0x18] sm:$0xff]
    %v1451 = vld [vmem:[#allocation7 + $0x20] sm:$0xff]
    %v1452 = vld [vmem:[#allocation7 + $0x28] sm:$0xff]
    %v1453 = vld [vmem:[#allocation7 + $0x30] sm:$0xff]
    %v1454 = vld [vmem:[#allocation7 + $0x38] sm:$0xff]
    %v1455 = vld [vmem:[#allocation7 + $0x40] sm:$0xff]
    %v1456 = vld [vmem:[#allocation7 + $0x48] sm:$0xff]
    %v1457 = vld [vmem:[#allocation7 + $0x50] sm:$0xff]
    %v1458 = vld [vmem:[#allocation7 + $0x58] sm:$0xff]
    %v1459 = vld [vmem:[#allocation7 + $0x60] sm:$0xff]
    %v1460 = vld [vmem:[#allocation7 + $0x68] sm:$0xff]
    %v1461 = vld [vmem:[#allocation7 + $0x70] sm:$0xff]
    %v1462 = vld [vmem:[#allocation7 + $0x78] sm:$0xff]
    %v1463 = vld [vmem:[#allocation7 + $0x80] sm:$0xff]
    %v1464 = vld [vmem:[#allocation7 + $0x88] sm:$0xff]
    %v1465 = vld [vmem:[#allocation7 + $0x90] sm:$0xff]
    %v1466 = vld [vmem:[#allocation7 + $0x98] sm:$0xff]
    %v1467 = vld [vmem:[#allocation7 + $0xa0] sm:$0xff]
    %v1468 = vld [vmem:[#allocation7 + $0xa8] sm:$0xff]
    %v1469 = vld [vmem:[#allocation7 + $0xb0] sm:$0xff]
    %v1470 = vld [vmem:[#allocation7 + $0xb8] sm:$0xff]
    %v1471 = vld [vmem:[#allocation7 + $0xc0] sm:$0xff]
    %v1472 = vld [vmem:[#allocation7 + $0xc8] sm:$0xff]
    %v1473 = vld [vmem:[#allocation7 + $0xd0] sm:$0xff]
    %v1474 = vld [vmem:[#allocation7 + $0xd8] sm:$0xff]
    %v1475 = vld [vmem:[#allocation7 + $0xe0] sm:$0xff]
    %v1476 = vld [vmem:[#allocation7 + $0xe8] sm:$0xff]
    %v1477 = vld [vmem:[#allocation7 + $0xf0] sm:$0xff]
    %v1478 = vld [vmem:[#allocation7 + $0xf8] sm:$0xff]
    %v1479 = vld [vmem:[#allocation7 + $0x100] sm:$0xff]
    %v1480 = vld [vmem:[#allocation7 + $0x108] sm:$0xff]
    %v1481 = vld [vmem:[#allocation7 + $0x110] sm:$0xff]
    %v1482 = vld [vmem:[#allocation7 + $0x118] sm:$0xff]
    %v1483 = vld [vmem:[#allocation7 + $0x120] sm:$0xff]
    %v1484 = vld [vmem:[#allocation7 + $0x128] sm:$0xff]
    %v1485 = vld [vmem:[#allocation7 + $0x130] sm:$0xff]
    %v1486 = vld [vmem:[#allocation7 + $0x138] sm:$0xff]
    %v1487 = vld [vmem:[#allocation7 + $0x140] sm:$0xff]
    %v1488 = vld [vmem:[#allocation7 + $0x148] sm:$0xff]
    %v1489 = vld [vmem:[#allocation7 + $0x150] sm:$0xff]
    %v1490 = vld [vmem:[#allocation7 + $0x158] sm:$0xff]
    %v1491 = vld [vmem:[#allocation7 + $0x160] sm:$0xff]
    %v1492 = vld [vmem:[#allocation7 + $0x168] sm:$0xff]
    %v1493 = vld [vmem:[#allocation7 + $0x170] sm:$0xff]
    %v1494 = vld [vmem:[#allocation7 + $0x178] sm:$0xff]
    %v1495 = vld [vmem:[#allocation7 + $0x180] sm:$0xff]
    %v1496 = vld [vmem:[#allocation7 + $0x188] sm:$0xff]
    %v1497 = vld [vmem:[#allocation7 + $0x190] sm:$0xff]
    %v1498 = vld [vmem:[#allocation7 + $0x198] sm:$0xff]
    %v1499 = vld [vmem:[#allocation7 + $0x1a0] sm:$0xff]
    %v1500 = vld [vmem:[#allocation7 + $0x1a8] sm:$0xff]
    %v1501 = vld [vmem:[#allocation7 + $0x1b0] sm:$0xff]
    %v1502 = vld [vmem:[#allocation7 + $0x1b8] sm:$0xff]
    %v1503 = vld [vmem:[#allocation7 + $0x1c0] sm:$0xff]
    %v1504 = vld [vmem:[#allocation7 + $0x1c8] sm:$0xff]
    %v1505 = vld [vmem:[#allocation7 + $0x1d0] sm:$0xff]
    %v1506 = vld [vmem:[#allocation7 + $0x1d8] sm:$0xff]
    %v1507 = vld [vmem:[#allocation7 + $0x1e0] sm:$0xff]
    %v1508 = vld [vmem:[#allocation7 + $0x1e8] sm:$0xff]
    %v1509 = vld [vmem:[#allocation7 + $0x1f0] sm:$0xff]
    %v1510 = vld [vmem:[#allocation7 + $0x1f8] sm:$0xff]
    %v1511 = vld [vmem:[#allocation7 + $0x200] sm:$0xff]
    %v1512 = vld [vmem:[#allocation7 + $0x208] sm:$0xff]
    %v1513 = vld [vmem:[#allocation7 + $0x210] sm:$0xff]
    %v1514 = vld [vmem:[#allocation7 + $0x218] sm:$0xff]
    %v1515 = vld [vmem:[#allocation7 + $0x220] sm:$0xff]
    %v1516 = vld [vmem:[#allocation7 + $0x228] sm:$0xff]
    %v1517 = vld [vmem:[#allocation7 + $0x230] sm:$0xff]
    %v1518 = vld [vmem:[#allocation7 + $0x238] sm:$0xff]
    %v1519 = vld [vmem:[#allocation7 + $0x240] sm:$0xff]
    %v1520 = vld [vmem:[#allocation7 + $0x248] sm:$0xff]
    %v1521 = vld [vmem:[#allocation7 + $0x250] sm:$0xff]
    %v1522 = vld [vmem:[#allocation7 + $0x258] sm:$0xff]
    %v1523 = vld [vmem:[#allocation7 + $0x260] sm:$0xff]
    %v1524 = vld [vmem:[#allocation7 + $0x268] sm:$0xff]
    %v1525 = vld [vmem:[#allocation7 + $0x270] sm:$0xff]
    %v1526 = vld [vmem:[#allocation7 + $0x278] sm:$0xff]
    %v1527 = vld [vmem:[#allocation7 + $0x280] sm:$0xff]
    %v1528 = vld [vmem:[#allocation7 + $0x288] sm:$0xff]
    %v1529 = vld [vmem:[#allocation7 + $0x290] sm:$0xff]
    %v1530 = vld [vmem:[#allocation7 + $0x298] sm:$0xff]
    %v1531 = vld [vmem:[#allocation7 + $0x2a0] sm:$0xff]
    %v1532 = vld [vmem:[#allocation7 + $0x2a8] sm:$0xff]
    %v1533 = vld [vmem:[#allocation7 + $0x2b0] sm:$0xff]
    %v1534 = vld [vmem:[#allocation7 + $0x2b8] sm:$0xff]
    %v1535 = vld [vmem:[#allocation7 + $0x2c0] sm:$0xff]
    %v1536 = vld [vmem:[#allocation7 + $0x2c8] sm:$0xff]
    %v1537 = vld [vmem:[#allocation7 + $0x2d0] sm:$0xff]
    %v1538 = vld [vmem:[#allocation7 + $0x2d8] sm:$0xff]
    %v1539 = vld [vmem:[#allocation7 + $0x2e0] sm:$0xff]
    %v1540 = vld [vmem:[#allocation7 + $0x2e8] sm:$0xff]
    %v1541 = vld [vmem:[#allocation7 + $0x2f0] sm:$0xff]
    %v1542 = vld [vmem:[#allocation7 + $0x2f8] sm:$0xff]
    %v1543 = vld [vmem:[#allocation7 + $0x300] sm:$0xff]
    %v1544 = vld [vmem:[#allocation7 + $0x308] sm:$0xff]
    %v1545 = vld [vmem:[#allocation7 + $0x310] sm:$0xff]
    %v1546 = vld [vmem:[#allocation7 + $0x318] sm:$0xff]
    %v1547 = vld [vmem:[#allocation7 + $0x320] sm:$0xff]
    %v1548 = vld [vmem:[#allocation7 + $0x328] sm:$0xff]
    %v1549 = vld [vmem:[#allocation7 + $0x330] sm:$0xff]
    %v1550 = vld [vmem:[#allocation7 + $0x338] sm:$0xff]
    %v1551 = vld [vmem:[#allocation7 + $0x340] sm:$0xff]
    %v1552 = vld [vmem:[#allocation7 + $0x348] sm:$0xff]
    %v1553 = vld [vmem:[#allocation7 + $0x350] sm:$0xff]
    %v1554 = vld [vmem:[#allocation7 + $0x358] sm:$0xff]
    %v1555 = vld [vmem:[#allocation7 + $0x360] sm:$0xff]
    %v1556 = vld [vmem:[#allocation7 + $0x368] sm:$0xff]
    %v1557 = vld [vmem:[#allocation7 + $0x370] sm:$0xff]
    %v1558 = vld [vmem:[#allocation7 + $0x378] sm:$0xff]
    %v1559 = vld [vmem:[#allocation7 + $0x380] sm:$0xff]
    %v1560 = vld [vmem:[#allocation7 + $0x388] sm:$0xff]
    %v1561 = vld [vmem:[#allocation7 + $0x390] sm:$0xff]
    %v1562 = vld [vmem:[#allocation7 + $0x398] sm:$0xff]
    %v1563 = vld [vmem:[#allocation7 + $0x3a0] sm:$0xff]
    %v1564 = vld [vmem:[#allocation7 + $0x3a8] sm:$0xff]
    %v1565 = vld [vmem:[#allocation7 + $0x3b0] sm:$0xff]
    %v1566 = vld [vmem:[#allocation7 + $0x3b8] sm:$0xff]
    %v1567 = vld [vmem:[#allocation7 + $0x3c0] sm:$0xff]
    %v1568 = vld [vmem:[#allocation7 + $0x3c8] sm:$0xff]
    %v1569 = vld [vmem:[#allocation7 + $0x3d0] sm:$0xff]
    %v1570 = vld [vmem:[#allocation7 + $0x3d8] sm:$0xff]
    %v1571 = vld [vmem:[#allocation7 + $0x3e0] sm:$0xff]
    %v1572 = vld [vmem:[#allocation7 + $0x3e8] sm:$0xff]
    %v1573 = vld [vmem:[#allocation7 + $0x3f0] sm:$0xff]
    %v1574 = vld [vmem:[#allocation7 + $0x3f8] sm:$0xff]
    %v1576 = vlaneseq
    %v1577 = vshrl.u32 %v1576, 7
    %v1578 = vsub.s32 0, %v1577
    %v1579 = vrot.slane %v256, %v1578
    %v1580 = vlaneseq
    %v1581 = vshrl.u32 %v1580, 7
    %v1582 = vsub.s32 1, %v1581
    %v1583 = vrot.slane %v256, %v1582
    %v1584 = vlaneseq
    %v1585 = vshrl.u32 %v1584, 7
    %v1586 = vsub.s32 2, %v1585
    %v1587 = vrot.slane %v256, %v1586
    %v1588 = vlaneseq
    %v1589 = vshrl.u32 %v1588, 7
    %v1590 = vsub.s32 3, %v1589
    %v1591 = vrot.slane %v256, %v1590
    %v1592 = vlaneseq
    %v1593 = vshrl.u32 %v1592, 7
    %v1594 = vsub.s32 4, %v1593
    %v1595 = vrot.slane %v256, %v1594
    %v1596 = vlaneseq
    %v1597 = vshrl.u32 %v1596, 7
    %v1598 = vsub.s32 5, %v1597
    %v1599 = vrot.slane %v256, %v1598
    %v1600 = vlaneseq
    %v1601 = vshrl.u32 %v1600, 7
    %v1602 = vsub.s32 6, %v1601
    %v1603 = vrot.slane %v256, %v1602
    %v1604 = vlaneseq
    %v1605 = vshrl.u32 %v1604, 7
    %v1606 = vsub.s32 7, %v1605
    %v1607 = vrot.slane %v256, %v1606
    %v1744 = vunpack.c.l.b16 %v1447
    %v1745 = vunpack.c.h.b16 %v1447
    %v1746 = vunpack.c.l.b16 %v1448
    %v1747 = vunpack.c.h.b16 %v1448
    %v1748 = vunpack.c.l.b16 %v1449
    %v1749 = vunpack.c.h.b16 %v1449
    %v1750 = vunpack.c.l.b16 %v1450
    %v1751 = vunpack.c.h.b16 %v1450
    %v1752 = vunpack.c.l.b16 %v1451
    %v1753 = vunpack.c.h.b16 %v1451
    %v1754 = vunpack.c.l.b16 %v1452
    %v1755 = vunpack.c.h.b16 %v1452
    %v1756 = vunpack.c.l.b16 %v1453
    %v1757 = vunpack.c.h.b16 %v1453
    %v1758 = vunpack.c.l.b16 %v1454
    %v1759 = vunpack.c.h.b16 %v1454
    %v1760 = vunpack.c.l.b16 %v1455
    %v1761 = vunpack.c.h.b16 %v1455
    %v1762 = vunpack.c.l.b16 %v1456
    %v1763 = vunpack.c.h.b16 %v1456
    %v1764 = vunpack.c.l.b16 %v1457
    %v1765 = vunpack.c.h.b16 %v1457
    %v1766 = vunpack.c.l.b16 %v1458
    %v1767 = vunpack.c.h.b16 %v1458
    %v1768 = vunpack.c.l.b16 %v1459
    %v1769 = vunpack.c.h.b16 %v1459
    %v1770 = vunpack.c.l.b16 %v1460
    %v1771 = vunpack.c.h.b16 %v1460
    %v1772 = vunpack.c.l.b16 %v1461
    %v1773 = vunpack.c.h.b16 %v1461
    %v1774 = vunpack.c.l.b16 %v1462
    %v1775 = vunpack.c.h.b16 %v1462
    %v1776 = vunpack.c.l.b16 %v1463
    %v1777 = vunpack.c.h.b16 %v1463
    %v1778 = vunpack.c.l.b16 %v1464
    %v1779 = vunpack.c.h.b16 %v1464
    %v1780 = vunpack.c.l.b16 %v1465
    %v1781 = vunpack.c.h.b16 %v1465
    %v1782 = vunpack.c.l.b16 %v1466
    %v1783 = vunpack.c.h.b16 %v1466
    %v1784 = vunpack.c.l.b16 %v1467
    %v1785 = vunpack.c.h.b16 %v1467
    %v1786 = vunpack.c.l.b16 %v1468
    %v1787 = vunpack.c.h.b16 %v1468
    %v1788 = vunpack.c.l.b16 %v1469
    %v1789 = vunpack.c.h.b16 %v1469
    %v1790 = vunpack.c.l.b16 %v1470
    %v1791 = vunpack.c.h.b16 %v1470
    %v1792 = vunpack.c.l.b16 %v1471
    %v1793 = vunpack.c.h.b16 %v1471
    %v1794 = vunpack.c.l.b16 %v1472
    %v1795 = vunpack.c.h.b16 %v1472
    %v1796 = vunpack.c.l.b16 %v1473
    %v1797 = vunpack.c.h.b16 %v1473
    %v1798 = vunpack.c.l.b16 %v1474
    %v1799 = vunpack.c.h.b16 %v1474
    %v1800 = vunpack.c.l.b16 %v1475
    %v1801 = vunpack.c.h.b16 %v1475
    %v1802 = vunpack.c.l.b16 %v1476
    %v1803 = vunpack.c.h.b16 %v1476
    %v1804 = vunpack.c.l.b16 %v1477
    %v1805 = vunpack.c.h.b16 %v1477
    %v1806 = vunpack.c.l.b16 %v1478
    %v1807 = vunpack.c.h.b16 %v1478
    %v1808 = vunpack.c.l.b16 %v1479
    %v1809 = vunpack.c.h.b16 %v1479
    %v1810 = vunpack.c.l.b16 %v1480
    %v1811 = vunpack.c.h.b16 %v1480
    %v1812 = vunpack.c.l.b16 %v1481
    %v1813 = vunpack.c.h.b16 %v1481
    %v1814 = vunpack.c.l.b16 %v1482
    %v1815 = vunpack.c.h.b16 %v1482
    %v1816 = vunpack.c.l.b16 %v1483
    %v1817 = vunpack.c.h.b16 %v1483
    %v1818 = vunpack.c.l.b16 %v1484
    %v1819 = vunpack.c.h.b16 %v1484
    %v1820 = vunpack.c.l.b16 %v1485
    %v1821 = vunpack.c.h.b16 %v1485
    %v1822 = vunpack.c.l.b16 %v1486
    %v1823 = vunpack.c.h.b16 %v1486
    %v1824 = vunpack.c.l.b16 %v1487
    %v1825 = vunpack.c.h.b16 %v1487
    %v1826 = vunpack.c.l.b16 %v1488
    %v1827 = vunpack.c.h.b16 %v1488
    %v1828 = vunpack.c.l.b16 %v1489
    %v1829 = vunpack.c.h.b16 %v1489
    %v1830 = vunpack.c.l.b16 %v1490
    %v1831 = vunpack.c.h.b16 %v1490
    %v1832 = vunpack.c.l.b16 %v1491
    %v1833 = vunpack.c.h.b16 %v1491
    %v1834 = vunpack.c.l.b16 %v1492
    %v1835 = vunpack.c.h.b16 %v1492
    %v1836 = vunpack.c.l.b16 %v1493
    %v1837 = vunpack.c.h.b16 %v1493
    %v1838 = vunpack.c.l.b16 %v1494
    %v1839 = vunpack.c.h.b16 %v1494
    %v1840 = vunpack.c.l.b16 %v1495
    %v1841 = vunpack.c.h.b16 %v1495
    %v1842 = vunpack.c.l.b16 %v1496
    %v1843 = vunpack.c.h.b16 %v1496
    %v1844 = vunpack.c.l.b16 %v1497
    %v1845 = vunpack.c.h.b16 %v1497
    %v1846 = vunpack.c.l.b16 %v1498
    %v1847 = vunpack.c.h.b16 %v1498
    %v1848 = vunpack.c.l.b16 %v1499
    %v1849 = vunpack.c.h.b16 %v1499
    %v1850 = vunpack.c.l.b16 %v1500
    %v1851 = vunpack.c.h.b16 %v1500
    %v1852 = vunpack.c.l.b16 %v1501
    %v1853 = vunpack.c.h.b16 %v1501
    %v1854 = vunpack.c.l.b16 %v1502
    %v1855 = vunpack.c.h.b16 %v1502
    %v1856 = vunpack.c.l.b16 %v1503
    %v1857 = vunpack.c.h.b16 %v1503
    %v1858 = vunpack.c.l.b16 %v1504
    %v1859 = vunpack.c.h.b16 %v1504
    %v1860 = vunpack.c.l.b16 %v1505
    %v1861 = vunpack.c.h.b16 %v1505
    %v1862 = vunpack.c.l.b16 %v1506
    %v1863 = vunpack.c.h.b16 %v1506
    %v1864 = vunpack.c.l.b16 %v1507
    %v1865 = vunpack.c.h.b16 %v1507
    %v1866 = vunpack.c.l.b16 %v1508
    %v1867 = vunpack.c.h.b16 %v1508
    %v1868 = vunpack.c.l.b16 %v1509
    %v1869 = vunpack.c.h.b16 %v1509
    %v1870 = vunpack.c.l.b16 %v1510
    %v1871 = vunpack.c.h.b16 %v1510
    %v1872 = vunpack.c.l.b16 %v1511
    %v1873 = vunpack.c.h.b16 %v1511
    %v1874 = vunpack.c.l.b16 %v1512
    %v1875 = vunpack.c.h.b16 %v1512
    %v1876 = vunpack.c.l.b16 %v1513
    %v1877 = vunpack.c.h.b16 %v1513
    %v1878 = vunpack.c.l.b16 %v1514
    %v1879 = vunpack.c.h.b16 %v1514
    %v1880 = vunpack.c.l.b16 %v1515
    %v1881 = vunpack.c.h.b16 %v1515
    %v1882 = vunpack.c.l.b16 %v1516
    %v1883 = vunpack.c.h.b16 %v1516
    %v1884 = vunpack.c.l.b16 %v1517
    %v1885 = vunpack.c.h.b16 %v1517
    %v1886 = vunpack.c.l.b16 %v1518
    %v1887 = vunpack.c.h.b16 %v1518
    %v1888 = vunpack.c.l.b16 %v1519
    %v1889 = vunpack.c.h.b16 %v1519
    %v1890 = vunpack.c.l.b16 %v1520
    %v1891 = vunpack.c.h.b16 %v1520
    %v1892 = vunpack.c.l.b16 %v1521
    %v1893 = vunpack.c.h.b16 %v1521
    %v1894 = vunpack.c.l.b16 %v1522
    %v1895 = vunpack.c.h.b16 %v1522
    %v1896 = vunpack.c.l.b16 %v1523
    %v1897 = vunpack.c.h.b16 %v1523
    %v1898 = vunpack.c.l.b16 %v1524
    %v1899 = vunpack.c.h.b16 %v1524
    %v1900 = vunpack.c.l.b16 %v1525
    %v1901 = vunpack.c.h.b16 %v1525
    %v1902 = vunpack.c.l.b16 %v1526
    %v1903 = vunpack.c.h.b16 %v1526
    %v1904 = vunpack.c.l.b16 %v1527
    %v1905 = vunpack.c.h.b16 %v1527
    %v1906 = vunpack.c.l.b16 %v1528
    %v1907 = vunpack.c.h.b16 %v1528
    %v1908 = vunpack.c.l.b16 %v1529
    %v1909 = vunpack.c.h.b16 %v1529
    %v1910 = vunpack.c.l.b16 %v1530
    %v1911 = vunpack.c.h.b16 %v1530
    %v1912 = vunpack.c.l.b16 %v1531
    %v1913 = vunpack.c.h.b16 %v1531
    %v1914 = vunpack.c.l.b16 %v1532
    %v1915 = vunpack.c.h.b16 %v1532
    %v1916 = vunpack.c.l.b16 %v1533
    %v1917 = vunpack.c.h.b16 %v1533
    %v1918 = vunpack.c.l.b16 %v1534
    %v1919 = vunpack.c.h.b16 %v1534
    %v1920 = vunpack.c.l.b16 %v1535
    %v1921 = vunpack.c.h.b16 %v1535
    %v1922 = vunpack.c.l.b16 %v1536
    %v1923 = vunpack.c.h.b16 %v1536
    %v1924 = vunpack.c.l.b16 %v1537
    %v1925 = vunpack.c.h.b16 %v1537
    %v1926 = vunpack.c.l.b16 %v1538
    %v1927 = vunpack.c.h.b16 %v1538
    %v1928 = vunpack.c.l.b16 %v1539
    %v1929 = vunpack.c.h.b16 %v1539
    %v1930 = vunpack.c.l.b16 %v1540
    %v1931 = vunpack.c.h.b16 %v1540
    %v1932 = vunpack.c.l.b16 %v1541
    %v1933 = vunpack.c.h.b16 %v1541
    %v1934 = vunpack.c.l.b16 %v1542
    %v1935 = vunpack.c.h.b16 %v1542
    %v1936 = vunpack.c.l.b16 %v1543
    %v1937 = vunpack.c.h.b16 %v1543
    %v1938 = vunpack.c.l.b16 %v1544
    %v1939 = vunpack.c.h.b16 %v1544
    %v1940 = vunpack.c.l.b16 %v1545
    %v1941 = vunpack.c.h.b16 %v1545
    %v1942 = vunpack.c.l.b16 %v1546
    %v1943 = vunpack.c.h.b16 %v1546
    %v1944 = vunpack.c.l.b16 %v1547
    %v1945 = vunpack.c.h.b16 %v1547
    %v1946 = vunpack.c.l.b16 %v1548
    %v1947 = vunpack.c.h.b16 %v1548
    %v1948 = vunpack.c.l.b16 %v1549
    %v1949 = vunpack.c.h.b16 %v1549
    %v1950 = vunpack.c.l.b16 %v1550
    %v1951 = vunpack.c.h.b16 %v1550
    %v1952 = vunpack.c.l.b16 %v1551
    %v1953 = vunpack.c.h.b16 %v1551
    %v1954 = vunpack.c.l.b16 %v1552
    %v1955 = vunpack.c.h.b16 %v1552
    %v1956 = vunpack.c.l.b16 %v1553
    %v1957 = vunpack.c.h.b16 %v1553
    %v1958 = vunpack.c.l.b16 %v1554
    %v1959 = vunpack.c.h.b16 %v1554
    %v1960 = vunpack.c.l.b16 %v1555
    %v1961 = vunpack.c.h.b16 %v1555
    %v1962 = vunpack.c.l.b16 %v1556
    %v1963 = vunpack.c.h.b16 %v1556
    %v1964 = vunpack.c.l.b16 %v1557
    %v1965 = vunpack.c.h.b16 %v1557
    %v1966 = vunpack.c.l.b16 %v1558
    %v1967 = vunpack.c.h.b16 %v1558
    %v1968 = vunpack.c.l.b16 %v1559
    %v1969 = vunpack.c.h.b16 %v1559
    %v1970 = vunpack.c.l.b16 %v1560
    %v1971 = vunpack.c.h.b16 %v1560
    %v1972 = vunpack.c.l.b16 %v1561
    %v1973 = vunpack.c.h.b16 %v1561
    %v1974 = vunpack.c.l.b16 %v1562
    %v1975 = vunpack.c.h.b16 %v1562
    %v1976 = vunpack.c.l.b16 %v1563
    %v1977 = vunpack.c.h.b16 %v1563
    %v1978 = vunpack.c.l.b16 %v1564
    %v1979 = vunpack.c.h.b16 %v1564
    %v1980 = vunpack.c.l.b16 %v1565
    %v1981 = vunpack.c.h.b16 %v1565
    %v1982 = vunpack.c.l.b16 %v1566
    %v1983 = vunpack.c.h.b16 %v1566
    %v1984 = vunpack.c.l.b16 %v1567
    %v1985 = vunpack.c.h.b16 %v1567
    %v1986 = vunpack.c.l.b16 %v1568
    %v1987 = vunpack.c.h.b16 %v1568
    %v1988 = vunpack.c.l.b16 %v1569
    %v1989 = vunpack.c.h.b16 %v1569
    %v1990 = vunpack.c.l.b16 %v1570
    %v1991 = vunpack.c.h.b16 %v1570
    %v1992 = vunpack.c.l.b16 %v1571
    %v1993 = vunpack.c.h.b16 %v1571
    %v1994 = vunpack.c.l.b16 %v1572
    %v1995 = vunpack.c.h.b16 %v1572
    %v1996 = vunpack.c.l.b16 %v1573
    %v1997 = vunpack.c.h.b16 %v1573
    %v1998 = vunpack.c.l.b16 %v1574
    %v1999 = vunpack.c.h.b16 %v1574
    %v2000 = vpack.c.b16 %v1752, %v1744
    %v2001 = vpack.c.b16 %v1753, %v1745
    %v2002 = vpack.c.b16 %v1754, %v1746
    %v2003 = vpack.c.b16 %v1755, %v1747
    %v2004 = vpack.c.b16 %v1756, %v1748
    %v2005 = vpack.c.b16 %v1757, %v1749
    %v2006 = vpack.c.b16 %v1758, %v1750
    %v2007 = vpack.c.b16 %v1759, %v1751
    %v2008 = vpack.c.b16 %v1768, %v1760
    %v2009 = vpack.c.b16 %v1769, %v1761
    %v2010 = vpack.c.b16 %v1770, %v1762
    %v2011 = vpack.c.b16 %v1771, %v1763
    %v2012 = vpack.c.b16 %v1772, %v1764
    %v2013 = vpack.c.b16 %v1773, %v1765
    %v2014 = vpack.c.b16 %v1774, %v1766
    %v2015 = vpack.c.b16 %v1775, %v1767
    %v2016 = vpack.c.b16 %v1784, %v1776
    %v2017 = vpack.c.b16 %v1785, %v1777
    %v2018 = vpack.c.b16 %v1786, %v1778
    %v2019 = vpack.c.b16 %v1787, %v1779
    %v2020 = vpack.c.b16 %v1788, %v1780
    %v2021 = vpack.c.b16 %v1789, %v1781
    %v2022 = vpack.c.b16 %v1790, %v1782
    %v2023 = vpack.c.b16 %v1791, %v1783
    %v2024 = vpack.c.b16 %v1800, %v1792
    %v2025 = vpack.c.b16 %v1801, %v1793
    %v2026 = vpack.c.b16 %v1802, %v1794
    %v2027 = vpack.c.b16 %v1803, %v1795
    %v2028 = vpack.c.b16 %v1804, %v1796
    %v2029 = vpack.c.b16 %v1805, %v1797
    %v2030 = vpack.c.b16 %v1806, %v1798
    %v2031 = vpack.c.b16 %v1807, %v1799
    %v2032 = vpack.c.b16 %v1816, %v1808
    %v2033 = vpack.c.b16 %v1817, %v1809
    %v2034 = vpack.c.b16 %v1818, %v1810
    %v2035 = vpack.c.b16 %v1819, %v1811
    %v2036 = vpack.c.b16 %v1820, %v1812
    %v2037 = vpack.c.b16 %v1821, %v1813
    %v2038 = vpack.c.b16 %v1822, %v1814
    %v2039 = vpack.c.b16 %v1823, %v1815
    %v2040 = vpack.c.b16 %v1832, %v1824
    %v2041 = vpack.c.b16 %v1833, %v1825
    %v2042 = vpack.c.b16 %v1834, %v1826
    %v2043 = vpack.c.b16 %v1835, %v1827
    %v2044 = vpack.c.b16 %v1836, %v1828
    %v2045 = vpack.c.b16 %v1837, %v1829
    %v2046 = vpack.c.b16 %v1838, %v1830
    %v2047 = vpack.c.b16 %v1839, %v1831
    %v2048 = vpack.c.b16 %v1848, %v1840
    %v2049 = vpack.c.b16 %v1849, %v1841
    %v2050 = vpack.c.b16 %v1850, %v1842
    %v2051 = vpack.c.b16 %v1851, %v1843
    %v2052 = vpack.c.b16 %v1852, %v1844
    %v2053 = vpack.c.b16 %v1853, %v1845
    %v2054 = vpack.c.b16 %v1854, %v1846
    %v2055 = vpack.c.b16 %v1855, %v1847
    %v2056 = vpack.c.b16 %v1864, %v1856
    %v2057 = vpack.c.b16 %v1865, %v1857
    %v2058 = vpack.c.b16 %v1866, %v1858
    %v2059 = vpack.c.b16 %v1867, %v1859
    %v2060 = vpack.c.b16 %v1868, %v1860
    %v2061 = vpack.c.b16 %v1869, %v1861
    %v2062 = vpack.c.b16 %v1870, %v1862
    %v2063 = vpack.c.b16 %v1871, %v1863
    %v2064 = vpack.c.b16 %v1880, %v1872
    %v2065 = vpack.c.b16 %v1881, %v1873
    %v2066 = vpack.c.b16 %v1882, %v1874
    %v2067 = vpack.c.b16 %v1883, %v1875
    %v2068 = vpack.c.b16 %v1884, %v1876
    %v2069 = vpack.c.b16 %v1885, %v1877
    %v2070 = vpack.c.b16 %v1886, %v1878
    %v2071 = vpack.c.b16 %v1887, %v1879
    %v2072 = vpack.c.b16 %v1896, %v1888
    %v2073 = vpack.c.b16 %v1897, %v1889
    %v2074 = vpack.c.b16 %v1898, %v1890
    %v2075 = vpack.c.b16 %v1899, %v1891
    %v2076 = vpack.c.b16 %v1900, %v1892
    %v2077 = vpack.c.b16 %v1901, %v1893
    %v2078 = vpack.c.b16 %v1902, %v1894
    %v2079 = vpack.c.b16 %v1903, %v1895
    %v2080 = vpack.c.b16 %v1912, %v1904
    %v2081 = vpack.c.b16 %v1913, %v1905
    %v2082 = vpack.c.b16 %v1914, %v1906
    %v2083 = vpack.c.b16 %v1915, %v1907
    %v2084 = vpack.c.b16 %v1916, %v1908
    %v2085 = vpack.c.b16 %v1917, %v1909
    %v2086 = vpack.c.b16 %v1918, %v1910
    %v2087 = vpack.c.b16 %v1919, %v1911
    %v2088 = vpack.c.b16 %v1928, %v1920
    %v2089 = vpack.c.b16 %v1929, %v1921
    %v2090 = vpack.c.b16 %v1930, %v1922
    %v2091 = vpack.c.b16 %v1931, %v1923
    %v2092 = vpack.c.b16 %v1932, %v1924
    %v2093 = vpack.c.b16 %v1933, %v1925
    %v2094 = vpack.c.b16 %v1934, %v1926
    %v2095 = vpack.c.b16 %v1935, %v1927
    %v2096 = vpack.c.b16 %v1944, %v1936
    %v2097 = vpack.c.b16 %v1945, %v1937
    %v2098 = vpack.c.b16 %v1946, %v1938
    %v2099 = vpack.c.b16 %v1947, %v1939
    %v2100 = vpack.c.b16 %v1948, %v1940
    %v2101 = vpack.c.b16 %v1949, %v1941
    %v2102 = vpack.c.b16 %v1950, %v1942
    %v2103 = vpack.c.b16 %v1951, %v1943
    %v2104 = vpack.c.b16 %v1960, %v1952
    %v2105 = vpack.c.b16 %v1961, %v1953
    %v2106 = vpack.c.b16 %v1962, %v1954
    %v2107 = vpack.c.b16 %v1963, %v1955
    %v2108 = vpack.c.b16 %v1964, %v1956
    %v2109 = vpack.c.b16 %v1965, %v1957
    %v2110 = vpack.c.b16 %v1966, %v1958
    %v2111 = vpack.c.b16 %v1967, %v1959
    %v2112 = vpack.c.b16 %v1976, %v1968
    %v2113 = vpack.c.b16 %v1977, %v1969
    %v2114 = vpack.c.b16 %v1978, %v1970
    %v2115 = vpack.c.b16 %v1979, %v1971
    %v2116 = vpack.c.b16 %v1980, %v1972
    %v2117 = vpack.c.b16 %v1981, %v1973
    %v2118 = vpack.c.b16 %v1982, %v1974
    %v2119 = vpack.c.b16 %v1983, %v1975
    %v2120 = vpack.c.b16 %v1992, %v1984
    %v2121 = vpack.c.b16 %v1993, %v1985
    %v2122 = vpack.c.b16 %v1994, %v1986
    %v2123 = vpack.c.b16 %v1995, %v1987
    %v2124 = vpack.c.b16 %v1996, %v1988
    %v2125 = vpack.c.b16 %v1997, %v1989
    %v2126 = vpack.c.b16 %v1998, %v1990
    %v2127 = vpack.c.b16 %v1999, %v1991
    %2256 = vmatprep.subr.bf16.mxu0 %v2001
    %2257 = vmatpush1.bf16.msra.mxu0 %v2000
    %2258 = vmatprep.subr.bf16.mxu0 %v2009
    %2259 = vmatpush1.bf16.msra.mxu0 %v2008
    %2260 = vmatprep.subr.bf16.mxu0 %v2017
    %2261 = vmatpush1.bf16.msra.mxu0 %v2016
    %2262 = vmatprep.subr.bf16.mxu0 %v2025
    %2263 = vmatpush1.bf16.msra.mxu0 %v2024
    %2264 = vmatprep.subr.bf16.mxu0 %v2033
    %2265 = vmatpush1.bf16.msra.mxu0 %v2032
    %2266 = vmatprep.subr.bf16.mxu0 %v2041
    %2267 = vmatpush1.bf16.msra.mxu0 %v2040
    %2268 = vmatprep.subr.bf16.mxu0 %v2049
    %2269 = vmatpush1.bf16.msra.mxu0 %v2048
    %2270 = vmatprep.subr.bf16.mxu0 %v2057
    %2271 = vmatpush1.bf16.msra.mxu0 %v2056
    %2272 = vmatprep.subr.bf16.mxu0 %v2065
    %2273 = vmatpush1.bf16.msra.mxu0 %v2064
    %2274 = vmatprep.subr.bf16.mxu0 %v2073
    %2275 = vmatpush1.bf16.msra.mxu0 %v2072
    %2276 = vmatprep.subr.bf16.mxu0 %v2081
    %2277 = vmatpush1.bf16.msra.mxu0 %v2080
    %2278 = vmatprep.subr.bf16.mxu0 %v2089
    %2279 = vmatpush1.bf16.msra.mxu0 %v2088
    %2280 = vmatprep.subr.bf16.mxu0 %v2097
    %2281 = vmatpush1.bf16.msra.mxu0 %v2096
    %2282 = vmatprep.subr.bf16.mxu0 %v2105
    %2283 = vmatpush1.bf16.msra.mxu0 %v2104
    %2284 = vmatprep.subr.bf16.mxu0 %v2113
    %2285 = vmatpush1.bf16.msra.mxu0 %v2112
    %2286 = vmatprep.subr.bf16.mxu0 %v2121
    %2287 = vmatpush1.bf16.msra.mxu0 %v2120
    %2288 = vmatprep.mubr.bf16.mxu0 %v1446
    %2289 = vmatmul.mubr.bf16.gmra.mrb[0].mxu0 %v1445
    %v2290 = vpop.f32.mrb[0].mxu0
    %v2291 = vadd.f32 %v1579, %v2290
    %v2292 = vpop.f32.mrb[0].mxu0
    %v2293 = vadd.f32 %v1583, %v2292
    %v2294 = vpop.f32.mrb[0].mxu0
    %v2295 = vpop.f32.mrb[0].mxu0
    %2296 = vdwg.mxu0
    %2297 = vmatprep.subr.bf16.mxu0 %v2003
    %2298 = vmatpush1.bf16.msra.mxu0 %v2002
    %2299 = vmatprep.subr.bf16.mxu0 %v2011
    %2300 = vmatpush1.bf16.msra.mxu0 %v2010
    %2301 = vmatprep.subr.bf16.mxu0 %v2019
    %2302 = vmatpush1.bf16.msra.mxu0 %v2018
    %2303 = vmatprep.subr.bf16.mxu0 %v2027
    %2304 = vmatpush1.bf16.msra.mxu0 %v2026
    %2305 = vmatprep.subr.bf16.mxu0 %v2035
    %2306 = vmatpush1.bf16.msra.mxu0 %v2034
    %2307 = vmatprep.subr.bf16.mxu0 %v2043
    %2308 = vmatpush1.bf16.msra.mxu0 %v2042
    %2309 = vmatprep.subr.bf16.mxu0 %v2051
    %2310 = vmatpush1.bf16.msra.mxu0 %v2050
    %2311 = vmatprep.subr.bf16.mxu0 %v2059
    %2312 = vmatpush1.bf16.msra.mxu0 %v2058
    %2313 = vmatprep.subr.bf16.mxu0 %v2067
    %2314 = vmatpush1.bf16.msra.mxu0 %v2066
    %2315 = vmatprep.subr.bf16.mxu0 %v2075
    %2316 = vmatpush1.bf16.msra.mxu0 %v2074
    %2317 = vmatprep.subr.bf16.mxu0 %v2083
    %2318 = vmatpush1.bf16.msra.mxu0 %v2082
    %2319 = vmatprep.subr.bf16.mxu0 %v2091
    %2320 = vmatpush1.bf16.msra.mxu0 %v2090
    %2321 = vmatprep.subr.bf16.mxu0 %v2099
    %2322 = vmatpush1.bf16.msra.mxu0 %v2098
    %2323 = vmatprep.subr.bf16.mxu0 %v2107
    %2324 = vmatpush1.bf16.msra.mxu0 %v2106
    %2325 = vmatprep.subr.bf16.mxu0 %v2115
    %2326 = vmatpush1.bf16.msra.mxu0 %v2114
    %2327 = vmatprep.subr.bf16.mxu0 %v2123
    %2328 = vmatpush1.bf16.msra.mxu0 %v2122
    %2329 = vmatprep.mubr.bf16.mxu0 %v1446
    %2330 = vmatmul.mubr.bf16.gmra.mrb[0].mxu0 %v1445
    %v2331 = vpop.f32.mrb[0].mxu0
    %v2332 = vadd.f32 %v1587, %v2331
    %v2333 = vpop.f32.mrb[0].mxu0
    %v2334 = vadd.f32 %v1591, %v2333
    %v2335 = vpop.f32.mrb[0].mxu0
    %v2336 = vpop.f32.mrb[0].mxu0
    %2337 = vdwg.mxu0
    %2338 = vmatprep.subr.bf16.mxu0 %v2005
    %2339 = vmatpush1.bf16.msra.mxu0 %v2004
    %2340 = vmatprep.subr.bf16.mxu0 %v2013
    %2341 = vmatpush1.bf16.msra.mxu0 %v2012
    %2342 = vmatprep.subr.bf16.mxu0 %v2021
    %2343 = vmatpush1.bf16.msra.mxu0 %v2020
    %2344 = vmatprep.subr.bf16.mxu0 %v2029
    %2345 = vmatpush1.bf16.msra.mxu0 %v2028
    %2346 = vmatprep.subr.bf16.mxu0 %v2037
    %2347 = vmatpush1.bf16.msra.mxu0 %v2036
    %2348 = vmatprep.subr.bf16.mxu0 %v2045
    %2349 = vmatpush1.bf16.msra.mxu0 %v2044
    %2350 = vmatprep.subr.bf16.mxu0 %v2053
    %2351 = vmatpush1.bf16.msra.mxu0 %v2052
    %2352 = vmatprep.subr.bf16.mxu0 %v2061
    %2353 = vmatpush1.bf16.msra.mxu0 %v2060
    %2354 = vmatprep.subr.bf16.mxu0 %v2069
    %2355 = vmatpush1.bf16.msra.mxu0 %v2068
    %2356 = vmatprep.subr.bf16.mxu0 %v2077
    %2357 = vmatpush1.bf16.msra.mxu0 %v2076
    %2358 = vmatprep.subr.bf16.mxu0 %v2085
    %2359 = vmatpush1.bf16.msra.mxu0 %v2084
    %2360 = vmatprep.subr.bf16.mxu0 %v2093
    %2361 = vmatpush1.bf16.msra.mxu0 %v2092
    %2362 = vmatprep.subr.bf16.mxu0 %v2101
    %2363 = vmatpush1.bf16.msra.mxu0 %v2100
    %2364 = vmatprep.subr.bf16.mxu0 %v2109
    %2365 = vmatpush1.bf16.msra.mxu0 %v2108
    %2366 = vmatprep.subr.bf16.mxu0 %v2117
    %2367 = vmatpush1.bf16.msra.mxu0 %v2116
    %2368 = vmatprep.subr.bf16.mxu0 %v2125
    %2369 = vmatpush1.bf16.msra.mxu0 %v2124
    %2370 = vmatprep.mubr.bf16.mxu0 %v1446
    %2371 = vmatmul.mubr.bf16.gmra.mrb[0].mxu0 %v1445
    %v2372 = vpop.f32.mrb[0].mxu0
    %v2373 = vadd.f32 %v1595, %v2372
    %v2374 = vpop.f32.mrb[0].mxu0
    %v2375 = vadd.f32 %v1599, %v2374
    %v2376 = vpop.f32.mrb[0].mxu0
    %v2377 = vpop.f32.mrb[0].mxu0
    %2378 = vdwg.mxu0
    %2379 = vmatprep.subr.bf16.mxu0 %v2007
    %2380 = vmatpush1.bf16.msra.mxu0 %v2006
    %2381 = vmatprep.subr.bf16.mxu0 %v2015
    %2382 = vmatpush1.bf16.msra.mxu0 %v2014
    %2383 = vmatprep.subr.bf16.mxu0 %v2023
    %2384 = vmatpush1.bf16.msra.mxu0 %v2022
    %2385 = vmatprep.subr.bf16.mxu0 %v2031
    %2386 = vmatpush1.bf16.msra.mxu0 %v2030
    %2387 = vmatprep.subr.bf16.mxu0 %v2039
    %2388 = vmatpush1.bf16.msra.mxu0 %v2038
    %2389 = vmatprep.subr.bf16.mxu0 %v2047
    %2390 = vmatpush1.bf16.msra.mxu0 %v2046
    %2391 = vmatprep.subr.bf16.mxu0 %v2055
    %2392 = vmatpush1.bf16.msra.mxu0 %v2054
    %2393 = vmatprep.subr.bf16.mxu0 %v2063
    %2394 = vmatpush1.bf16.msra.mxu0 %v2062
    %2395 = vmatprep.subr.bf16.mxu0 %v2071
    %2396 = vmatpush1.bf16.msra.mxu0 %v2070
    %2397 = vmatprep.subr.bf16.mxu0 %v2079
    %2398 = vmatpush1.bf16.msra.mxu0 %v2078
    %2399 = vmatprep.subr.bf16.mxu0 %v2087
    %2400 = vmatpush1.bf16.msra.mxu0 %v2086
    %2401 = vmatprep.subr.bf16.mxu0 %v2095
    %2402 = vmatpush1.bf16.msra.mxu0 %v2094
    %2403 = vmatprep.subr.bf16.mxu0 %v2103
    %2404 = vmatpush1.bf16.msra.mxu0 %v2102
    %2405 = vmatprep.subr.bf16.mxu0 %v2111
    %2406 = vmatpush1.bf16.msra.mxu0 %v2110
    %2407 = vmatprep.subr.bf16.mxu0 %v2119
    %2408 = vmatpush1.bf16.msra.mxu0 %v2118
    %2409 = vmatprep.subr.bf16.mxu0 %v2127
    %2410 = vmatpush1.bf16.msra.mxu0 %v2126
    %2411 = vmatprep.mubr.bf16.mxu0 %v1446
    %2412 = vmatmul.mubr.bf16.gmra.mrb[0].mxu0 %v1445
    %v2413 = vpop.f32.mrb[0].mxu0
    %v2414 = vadd.f32 %v1603, %v2413
    %v2415 = vpop.f32.mrb[0].mxu0
    %v2416 = vadd.f32 %v1607, %v2415
    %v2417 = vpop.f32.mrb[0].mxu0
    %v2418 = vpop.f32.mrb[0].mxu0
    %2419 = vdwg.mxu0
    %2420 = vst [vmem:[#allocation10] sm:$0xff] %v2291
    %2421 = vst [vmem:[#allocation10 + $0x8] sm:$0xff] %v2293
    %2422 = vst [vmem:[#allocation10 + $0x10] sm:$0xff] %v2332
    %2423 = vst [vmem:[#allocation10 + $0x18] sm:$0xff] %v2334
    %2424 = vst [vmem:[#allocation10 + $0x20] sm:$0xff] %v2373
    %2425 = vst [vmem:[#allocation10 + $0x28] sm:$0xff] %v2375
    %2426 = vst [vmem:[#allocation10 + $0x30] sm:$0xff] %v2414
    %2427 = vst [vmem:[#allocation10 + $0x38] sm:$0xff] %v2416
    %2428 = vst [vmem:[#allocation11] sm:$0xff] %v1298
    %2429 = vst [vmem:[#allocation13] sm:$0xff] %v1300
    // Predicated region
    $region38: #{tpu_custom_call.1} parent=1 // pred_check
      _
    $region39: #{tpu_custom_call.1} parent=1 // pred_check_branch
      %2431 = sbr.rel (0) target = $region41
    $region40: #{tpu_custom_call.1} parent=1 // pred_region
      %s2433 = ssub.s32 1024, 1024
      %2434 = vsyncadd [#allocation4], %s2433
      %s2436 = sshll.u32 [#allocation10], 4
      %s2437 = int_to_ptr.vmem [resolvable:$true] %s2436
      %2439 = dma.vmem_to_hbm [thread:$0]  %s2437, 1024, %s5, [#allocation4]
    $region41: #{tpu_custom_call.1} parent=1 // pred_fallthru
      _
    // Predicated region
    $region42: #{tpu_custom_call.1} parent=1 // pred_check
      _
    $region43: #{tpu_custom_call.1} parent=1 // pred_check_branch
      %2441 = sbr.rel (0) target = $region45
    $region44: #{tpu_custom_call.1} parent=1 // pred_region
      %s2443 = ssub.s32 128, 128
      %2444 = vsyncadd [#allocation12], %s2443
      %s2446 = sshll.u32 [#allocation11], 4
      %s2447 = int_to_ptr.vmem [resolvable:$true] %s2446
      %2449 = dma.vmem_to_hbm [thread:$0]  %s2447, 128, %s6, [#allocation12]
    $region45: #{tpu_custom_call.1} parent=1 // pred_fallthru
      _
    // Predicated region
    $region46: #{tpu_custom_call.1} parent=1 // pred_check
      _
    $region47: #{tpu_custom_call.1} parent=1 // pred_check_branch
      %2451 = sbr.rel (0) target = $region49
    $region48: #{tpu_custom_call.1} parent=1 // pred_region
      %s2453 = ssub.s32 128, 128
      %2454 = vsyncadd [#allocation12], %s2453
      %s2456 = sshll.u32 [#allocation13], 4
      %s2457 = int_to_ptr.vmem [resolvable:$true] %s2456
      %2459 = dma.vmem_to_hbm [thread:$0]  %s2457, 128, %s7, [#allocation12]
    $region49: #{tpu_custom_call.1} parent=1 // pred_fallthru
      _
    // Predicated region
    $region50: #{tpu_custom_call.1} parent=1 // pred_check
      _
    $region51: #{tpu_custom_call.1} parent=1 // pred_check_branch
      %2461 = sbr.rel (0) target = $region53
    $region52: #{tpu_custom_call.1} parent=1 // pred_region
      %2462 = dma.done [#allocation4], 1024
    $region53: #{tpu_custom_call.1} parent=1 // pred_fallthru
      _
    // Predicated region
    $region54: #{tpu_custom_call.1} parent=1 // pred_check
      _
    $region55: #{tpu_custom_call.1} parent=1 // pred_check_branch
      %2464 = sbr.rel (0) target = $region57
    $region56: #{tpu_custom_call.1} parent=1 // pred_region
      %2465 = dma.done [#allocation12], 128
    $region57: #{tpu_custom_call.1} parent=1 // pred_fallthru
      _
    // Predicated region
    $region58: #{tpu_custom_call.1} parent=1 // pred_check
      _
    $region59: #{tpu_custom_call.1} parent=1 // pred_check_branch
      %2467 = sbr.rel (0) target = $region61
    $region60: #{tpu_custom_call.1} parent=1 // pred_region
      %2468 = dma.done [#allocation12], 128
    $region61: #{tpu_custom_call.1} parent=1 // pred_fallthru
      _
    %2469 = vsyncpa [#allocation3], 1
    %2470 = vsyncpa [#allocation6], 1
    %2471 = vsyncpa [#allocation9], 1
    %2472 = vsyncpa [#allocation4], 1
    %2473 = vsyncpa [#allocation12], 1

</llo_original>
